<compile_context>
chip_gen: v6e
topology: v6e:2x2x1
jax: 0.10.0
libtpu: 0.0.40
codegen_flags: <defaults>
</compile_context>

<pallas_src>
import math
from functools import partial

import jax
import jax.numpy as jnp
from jax import lax
from jax.experimental import pallas as pl
from jax.experimental.pallas import tpu as pltpu

STAGE_NUM = 3                     # EM iteration count (EMAU default)
MATMUL_DTYPE = jnp.bfloat16       # MXU operand dtype; accumulation stays f32


def emau_kernel(x_ref, w1_ref, b1_ref, mu0_ref, w2_ref, b2_ref,
                out_ref, mu_out_ref, x1_ref, *, n_valid, stage_num):
    """One image per grid step (batch dim squeezed out of the refs).

    x_ref      : (C, Np) f32   input pixels, channel-major, lane-dense (Np = padded N)
    w1_ref     : (C, C)  f32   conv1 1x1 weight
    b1_ref     : (C, 1)  f32   conv1 bias (column -> lane broadcast)
    mu0_ref    : (C, K)  f32   initial bases mu
    w2_ref     : (C, C)  f32   conv2 1x1 weight (eval-BN scale folded)
    b2_ref     : (C, 1)  f32   folded eval-BN shift
    out_ref    : (C, Np) f32   output slab for this image
    mu_out_ref : (C, K)  f32   converged bases for this image
    x1_ref     : (C, Np) bf16  VMEM scratch for the conv1 activation
    """
    c, n_pad = x_ref.shape
    k_dim = mu0_ref.shape[1]

    # conv1 (1x1 + bias).  The residual x is read inline (consumed by the bf16
    # cast immediately) and re-read only at the final add: no long f32 live range.
    x1_f32 = jnp.dot(w1_ref[...].astype(MATMUL_DTYPE),
                     x_ref[...].astype(MATMUL_DTYPE),
                     preferred_element_type=jnp.float32) + b1_ref[...]
    x1_ref[...] = x1_f32.astype(MATMUL_DTYPE)     # f32 intermediate dies here

    # Lane mask over padded pixels (only materialized when padding exists).
    # Hoisted out of the EM loop (JAX does not CSE broadcasts).
    if n_pad != n_valid:
        pix_mask = lax.broadcasted_iota(jnp.int32, (k_dim, n_pad), 1) < n_valid
    else:
        pix_mask = None

    mu = mu0_ref[...]                              # (C, K) f32
    z = None
    for _ in range(stage_num):                     # static unrolled EM loop
        x1 = x1_ref[...]                           # (C, Np) bf16, live only this iter
        # E-step: z = mu^T @ x1 -> (K, Np), lane-dense, no physical transpose.
        z = lax.dot_general(mu.astype(MATMUL_DTYPE), x1,
                            (((0,), (0,)), ((), ())),
                            preferred_element_type=jnp.float32)       # (K, Np)
        # softmax over K (sublane reduce); elementwise path stays f32.
        z = jnp.exp(z - jnp.max(z, axis=0, keepdims=True))
        z = z * pl.reciprocal(jnp.sum(z, axis=0, keepdims=True), approx=False)
        if pix_mask is not None:
            z = jnp.where(pix_mask, z, 0.0)        # padded pixels contribute nothing
        # M-step: z_ = z / (1e-6 + sum over pixels)  (lane reduce)
        z_n = z * pl.reciprocal(1e-6 + jnp.sum(z, axis=1, keepdims=True),
                                approx=False)                         # (K, Np)
        # mu = x1 @ z_^T -> (C, K): contract over pixels, transpose-free.
        mu = lax.dot_general(x1, z_n.astype(MATMUL_DTYPE),
                             (((1,), (1,)), ((), ())),
                             preferred_element_type=jnp.float32)      # (C, K)
        # L2-normalize over channels with a single EUP rsqrt.
        mu = mu * lax.rsqrt(jnp.sum(mu * mu, axis=0, keepdims=True) + 1e-12)

    mu_out_ref[...] = mu    # K < 128 lanes -> masked partial store; tiny, harmless.

    # Attention readout: relu(mu @ z) kept live in bf16 (no VMEM round trip),
    # then conv2 (eval-BN folded), residual add, final ReLU.  Output lane-dense.
    att = jnp.dot(mu.astype(MATMUL_DTYPE), z.astype(MATMUL_DTYPE),
                  preferred_element_type=jnp.float32)                 # (C, Np)
    att = jnp.maximum(att, 0.0).astype(MATMUL_DTYPE)
    y = jnp.dot(w2_ref[...].astype(MATMUL_DTYPE), att,
                preferred_element_type=jnp.float32) + b2_ref[...]
    out_ref[...] = jnp.maximum(y + x_ref[...], 0.0)


def _round_up(x, m):
    return ((x + m - 1) // m) * m


def _vmem_budget_cap():
    """~80% of per-core physical VMEM: ~51 MiB on v7x, ~102 MiB on v5e/v6e."""
    try:
        cap = pltpu.get_tpu_info().vmem_capacity_bytes
    except Exception:           # query unavailable -> assume smallest (v7x) VMEM
        cap = 64 << 20
    return int(cap * 0.8)


def _vmem_limit_bytes(c, n_pad, k):
    """Estimate of the per-image working set, clamped to the generation cap."""
    slab_f32 = c * n_pad * 4
    slab_bf16 = c * n_pad * 2
    est = (2 * slab_f32                 # x input block, double-buffered
           + 2 * slab_f32               # out block, double-buffered
           + slab_f32                   # f32 conv1 activation before bf16 cast
           + 2 * slab_bf16              # bf16 x1 scratch + live relu(mu @ z)
           + 4 * c * c * 4              # conv weights (double-buffered)
           + 8 * (c * k + k * n_pad) * 4    # mu / z temporaries
           + (4 << 20))                 # headroom (semaphores, compiler scratch)
    cap = _vmem_budget_cap()
    # TODO(synk): N-tile the conv/EM stages when a single image exceeds `cap`
    #             (very large crops); today we only clamp the limit.
    return int(min(max(est, 32 << 20), cap))


def emau_forward(x, w1, b1, mu0, w2, bn_gamma, bn_beta, bn_mean, bn_var,
                 bn_eps=1e-5, stage_num=STAGE_NUM):
    """EMAU forward. x is NCHW float32. Returns (out NCHW, mu (B, C, K))."""
    B, C, H, W = x.shape
    N = H * W
    K = mu0.shape[-1]
    N_pad = _round_up(N, 128)           # keep every large load/store lane-dense

    # Natural (B, C, N) layout: pure reshape (no data movement), pad pixels only
    # if N is not 128-aligned.
    x_bcn = x.reshape(B, C, N).astype(jnp.float32)
    if N_pad != N:
        x_bcn = jnp.pad(x_bcn, ((0, 0), (0, 0), (0, N_pad - N)))

    # Fold eval-mode BN into conv2's weight/bias (wrapper glue, no compute hoisted).
    scale = bn_gamma / jnp.sqrt(bn_var + bn_eps)                       # (C,)
    w2_eff = (w2 * scale[:, None]).astype(jnp.float32)                 # (C, C)
    b2_eff = (bn_beta - bn_mean * scale).reshape(C, 1).astype(jnp.float32)
    b1_col = b1.reshape(C, 1).astype(jnp.float32)
    mu0_2d = mu0.reshape(C, K).astype(jnp.float32)

    kernel = partial(emau_kernel, n_valid=N, stage_num=stage_num)

    out_bcn, mu_out = pl.pallas_call(
        kernel,
        out_shape=(
            jax.ShapeDtypeStruct((B, C, N_pad), jnp.float32),
            jax.ShapeDtypeStruct((B, C, K), jnp.float32),
        ),
        grid_spec=pltpu.PrefetchScalarGridSpec(
            num_scalar_prefetch=0,
            grid=(B,),                                   # one image per grid step
            in_specs=[
                pl.BlockSpec((pl.Squeezed(), C, N_pad), lambda b: (b, 0, 0)),  # x
                pl.BlockSpec((C, C), lambda b: (0, 0)),                        # w1
                pl.BlockSpec((C, 1), lambda b: (0, 0)),                        # b1
                pl.BlockSpec((C, K), lambda b: (0, 0)),                        # mu0
                pl.BlockSpec((C, C), lambda b: (0, 0)),                        # w2 (folded)
                pl.BlockSpec((C, 1), lambda b: (0, 0)),                        # b2 (folded)
            ],
            out_specs=[
                pl.BlockSpec((pl.Squeezed(), C, N_pad), lambda b: (b, 0, 0)),
                pl.BlockSpec((pl.Squeezed(), C, K), lambda b: (b, 0, 0)),
            ],
            scratch_shapes=[pltpu.VMEM((C, N_pad), MATMUL_DTYPE)],   # bf16 x1
        ),
        compiler_params=pltpu.CompilerParams(
            dimension_semantics=("parallel",),           # v7x megacore over images
            vmem_limit_bytes=_vmem_limit_bytes(C, N_pad, K)),
    )(x_bcn, w1.astype(jnp.float32), b1_col, mu0_2d, w2_eff, b2_eff)

    out = out_bcn[:, :, :N].reshape(B, C, H, W)
    return out, mu_out


def emau_reference(x, w1, b1, mu0, w2, bn_gamma, bn_beta, bn_mean, bn_var,
                   bn_eps=1e-5, stage_num=STAGE_NUM):
    """Pure-JAX f32 reference mirroring the PyTorch EMAU forward (validation)."""
    B, C, H, W = x.shape
    N = H * W
    idn = x
    xf = x.reshape(B, C, N)
    xf = jnp.einsum('oc,bcn->bon', w1, xf) + b1[None, :, None]
    mu = jnp.broadcast_to(mu0, (B, C, mu0.shape[-1]))
    z = None
    for _ in range(stage_num):
        z = jnp.einsum('bcn,bck->bnk', xf, mu)
        z = jax.nn.softmax(z, axis=2)
        z_ = z / (1e-6 + jnp.sum(z, axis=1, keepdims=True))
        mu = jnp.einsum('bcn,bnk->bck', xf, z_)
        mu = mu / (1e-6 + jnp.linalg.norm(mu, axis=1, keepdims=True))
    y = jnp.einsum('bck,bnk->bcn', mu, z).reshape(B, C, H, W)
    y = jnp.maximum(y, 0.0)
    y = jnp.einsum('oc,bchw->bohw', w2, y)
    scale = bn_gamma / jnp.sqrt(bn_var + bn_eps)
    y = y * scale[None, :, None, None] + (bn_beta - bn_mean * scale)[None, :, None, None]
    y = jnp.maximum(y + idn, 0.0)
    return y, mu


def init_params(key, c, k):
    """Deterministic parameter init following EMAU.__init__ semantics."""
    k_mu, k_w1, k_b1, k_w2, k_bn = jax.random.split(key, 5)
    mu = jax.random.normal(k_mu, (1, c, k), jnp.float32) * math.sqrt(2.0 / k)
    mu = mu / (1e-6 + jnp.linalg.norm(mu, axis=1, keepdims=True))   # l2norm over C
    # 1x1 convs: n = 1*1*out_channels = c  ->  std = sqrt(2/c)
    w1 = jax.random.normal(k_w1, (c, c), jnp.float32) * math.sqrt(2.0 / c)
    b1 = 0.05 * jax.random.normal(k_b1, (c,), jnp.float32)
    w2 = jax.random.normal(k_w2, (c, c), jnp.float32) * math.sqrt(2.0 / c)
    kg, kb, km, kv = jax.random.split(k_bn, 4)
    bn_gamma = 1.0 + 0.1 * jax.random.normal(kg, (c,), jnp.float32)
    bn_beta = 0.1 * jax.random.normal(kb, (c,), jnp.float32)
    bn_mean = 0.1 * jax.random.normal(km, (c,), jnp.float32)
    bn_var = 0.5 + jax.random.uniform(kv, (c,), jnp.float32)
    return mu, w1, b1, w2, bn_gamma, bn_beta, bn_mean, bn_var


def _run_case(B, C, H, W, K, key):
    k_x, k_p = jax.random.split(key)
    x = jax.random.normal(k_x, (B, C, H, W), jnp.float32)
    mu0, w1, b1, w2, g, bb, m, v = init_params(k_p, C, K)

    out, mu_out = emau_forward(x, w1, b1, mu0, w2, g, bb, m, v)
    out = jax.block_until_ready(out)
    mu_out = jax.block_until_ready(mu_out)

    ref_out, ref_mu = emau_reference(x, w1, b1, mu0, w2, g, bb, m, v)
    assert out.shape == (B, C, H, W) and mu_out.shape == (B, C, K)
    # Tolerance accounts for bf16 MXU operands (accumulation is f32).
    assert jnp.allclose(out, ref_out, atol=5e-2, rtol=5e-2)
    assert jnp.allclose(mu_out, ref_mu, atol=5e-2, rtol=5e-2)


if __name__ == "__main__":
    key = jax.random.PRNGKey(0)
    k1, k2 = jax.random.split(key)

    # lane-aligned spatial size (N = 256, no padding path)
    _run_case(B=4, C=32, H=16, W=16, K=16, key=k1)
    # unaligned spatial size (N = 225 -> padded to 256, masked lanes path)
    _run_case(B=4, C=32, H=15, W=15, K=16, key=k2)

    print("KERNEL_OK")
</pallas_src>

<mosaic_0001>
module attributes {stable_mosaic.version = 11 : i64} {
  func.func @emau_kernel(%arg0: i32, %arg1: memref<1x32x256xf32, #tpu.memory_space<vmem>>, %arg2: memref<32x32xf32, #tpu.memory_space<vmem>>, %arg3: memref<32x1xf32, #tpu.memory_space<vmem>>, %arg4: memref<32x16xf32, #tpu.memory_space<vmem>>, %arg5: memref<32x32xf32, #tpu.memory_space<vmem>>, %arg6: memref<32x1xf32, #tpu.memory_space<vmem>>, %arg7: memref<1x32x256xf32, #tpu.memory_space<vmem>>, %arg8: memref<1x32x16xf32, #tpu.memory_space<vmem>>, %arg9: memref<32x256xbf16, #tpu.memory_space<vmem>>) attributes {dimension_semantics = [#tpu.dimension_semantics<parallel>], iteration_bounds = array<i64: 4>, scalar_prefetch = 0 : i64, scratch_operands = 1 : i64, tpu.core_type = #tpu.core_type<tc>, window_params = [{transform_indices = @transform_0, window_bounds = array<i64: 1, 32, 256>}, {pipeline_mode = #tpu.pipeline_mode<synchronous>, transform_indices = @transform_1, window_bounds = array<i64: 32, 32>}, {pipeline_mode = #tpu.pipeline_mode<synchronous>, transform_indices = @transform_2, window_bounds = array<i64: 32, 1>}, {pipeline_mode = #tpu.pipeline_mode<synchronous>, transform_indices = @transform_3, window_bounds = array<i64: 32, 16>}, {pipeline_mode = #tpu.pipeline_mode<synchronous>, transform_indices = @transform_4, window_bounds = array<i64: 32, 32>}, {pipeline_mode = #tpu.pipeline_mode<synchronous>, transform_indices = @transform_5, window_bounds = array<i64: 32, 1>}, {transform_indices = @transform_6, window_bounds = array<i64: 1, 32, 256>}, {transform_indices = @transform_7, window_bounds = array<i64: 1, 32, 16>}]} {
    %c0 = arith.constant 0 : index
    %c0_0 = arith.constant 0 : index
    %0 = vector.load %arg2[%c0, %c0_0] : memref<32x32xf32, #tpu.memory_space<vmem>>, vector<32x32xf32>
    %1 = arith.truncf %0 : vector<32x32xf32> to vector<32x32xbf16>
    %c0_1 = arith.constant 0 : index
    %c0_2 = arith.constant 0 : index
    %c0_3 = arith.constant 0 : index
    %2 = vector.load %arg1[%c0_1, %c0_2, %c0_3] : memref<1x32x256xf32, #tpu.memory_space<vmem>>, vector<1x32x256xf32>
    %3 = vector.shape_cast %2 : vector<1x32x256xf32> to vector<32x256xf32>
    %4 = arith.truncf %3 : vector<32x256xf32> to vector<32x256xbf16>
    %cst = arith.constant dense<0.000000e+00> : vector<32x256xf32>
    %5 = tpu.matmul %1, %4, %cst {dimension_numbers = #tpu.dot_dimension_numbers<[1], [0], [0], [1], [0, 0, 1, 1], [], []>} : vector<32x32xbf16>, vector<32x256xbf16>, vector<32x256xf32> -> vector<32x256xf32>
    %c0_4 = arith.constant 0 : index
    %c0_5 = arith.constant 0 : index
    %6 = vector.load %arg3[%c0_4, %c0_5] : memref<32x1xf32, #tpu.memory_space<vmem>>, vector<32x1xf32>
    %7 = vector.broadcast %6 : vector<32x1xf32> to vector<32x256xf32>
    %8 = arith.addf %5, %7 : vector<32x256xf32>
    %9 = arith.truncf %8 : vector<32x256xf32> to vector<32x256xbf16>
    %c0_6 = arith.constant 0 : index
    %c0_7 = arith.constant 0 : index
    %10 = vector.load %arg9[%c0_6, %c0_7] : memref<32x256xbf16, #tpu.memory_space<vmem>>, vector<32x256xbf16>
    tpu.vector_store %arg9[%c0_6, %c0_7], %9 {strides = array<i32>} : memref<32x256xbf16, #tpu.memory_space<vmem>>, vector<32x256xbf16>,
    %c0_8 = arith.constant 0 : index
    %c0_9 = arith.constant 0 : index
    %11 = vector.load %arg4[%c0_8, %c0_9] : memref<32x16xf32, #tpu.memory_space<vmem>>, vector<32x16xf32>
    %c0_10 = arith.constant 0 : index
    %c0_11 = arith.constant 0 : index
    %12 = vector.load %arg9[%c0_10, %c0_11] : memref<32x256xbf16, #tpu.memory_space<vmem>>, vector<32x256xbf16>
    %13 = arith.truncf %11 : vector<32x16xf32> to vector<32x16xbf16>
    %cst_12 = arith.constant dense<0.000000e+00> : vector<16x256xf32>
    %14 = tpu.matmul %13, %12, %cst_12 {dimension_numbers = #tpu.dot_dimension_numbers<[0], [0], [1], [1], [0, 1, 1, 1], [], []>} : vector<32x16xbf16>, vector<32x256xbf16>, vector<16x256xf32> -> vector<16x256xf32>
    %cst_13 = arith.constant dense<0xFF800000> : vector<256xf32>
    %15 = vector.multi_reduction <maximumf>, %14, %cst_13 [0] : vector<16x256xf32> to vector<256xf32>
    %16 = vector.shape_cast %15 : vector<256xf32> to vector<1x256xf32>
    %17 = vector.broadcast %16 : vector<1x256xf32> to vector<16x256xf32>
    %18 = arith.subf %14, %17 : vector<16x256xf32>
    %19 = math.exp %18 : vector<16x256xf32>
    %cst_14 = arith.constant dense<0.000000e+00> : vector<256xf32>
    %20 = vector.multi_reduction <add>, %19, %cst_14 [0] : vector<16x256xf32> to vector<256xf32>
    %21 = vector.shape_cast %20 : vector<256xf32> to vector<1x256xf32>
    %22 = tpu.reciprocal %21 : vector<1x256xf32> -> vector<1x256xf32>
    %23 = vector.broadcast %22 : vector<1x256xf32> to vector<16x256xf32>
    %24 = arith.mulf %19, %23 : vector<16x256xf32>
    %cst_15 = arith.constant dense<0.000000e+00> : vector<16xf32>
    %25 = vector.multi_reduction <add>, %24, %cst_15 [1] : vector<16x256xf32> to vector<16xf32>
    %26 = vector.shape_cast %25 : vector<16xf32> to vector<16x1xf32>
    %cst_16 = arith.constant 9.99999997E-7 : f32
    %27 = vector.broadcast %cst_16 : f32 to vector<16x1xf32>
    %28 = arith.addf %27, %26 : vector<16x1xf32>
    %29 = tpu.reciprocal %28 : vector<16x1xf32> -> vector<16x1xf32>
    %30 = vector.broadcast %29 : vector<16x1xf32> to vector<16x256xf32>
    %31 = arith.mulf %24, %30 : vector<16x256xf32>
    %32 = arith.truncf %31 : vector<16x256xf32> to vector<16x256xbf16>
    %cst_17 = arith.constant dense<0.000000e+00> : vector<32x16xf32>
    %33 = tpu.matmul %12, %32, %cst_17 {dimension_numbers = #tpu.dot_dimension_numbers<[1], [1], [0], [0], [0, 0, 1, 0], [], []>} : vector<32x256xbf16>, vector<16x256xbf16>, vector<32x16xf32> -> vector<32x16xf32>
    %34 = arith.mulf %33, %33 : vector<32x16xf32>
    %cst_18 = arith.constant dense<0.000000e+00> : vector<16xf32>
    %35 = vector.multi_reduction <add>, %34, %cst_18 [0] : vector<32x16xf32> to vector<16xf32>
    %36 = vector.shape_cast %35 : vector<16xf32> to vector<1x16xf32>
    %cst_19 = arith.constant 9.99999996E-13 : f32
    %37 = vector.broadcast %cst_19 : f32 to vector<1x16xf32>
    %38 = arith.addf %36, %37 : vector<1x16xf32>
    %39 = math.rsqrt %38 : vector<1x16xf32>
    %40 = vector.broadcast %39 : vector<1x16xf32> to vector<32x16xf32>
    %41 = arith.mulf %33, %40 : vector<32x16xf32>
    %c0_20 = arith.constant 0 : index
    %c0_21 = arith.constant 0 : index
    %42 = vector.load %arg9[%c0_20, %c0_21] : memref<32x256xbf16, #tpu.memory_space<vmem>>, vector<32x256xbf16>
    %43 = arith.truncf %41 : vector<32x16xf32> to vector<32x16xbf16>
    %cst_22 = arith.constant dense<0.000000e+00> : vector<16x256xf32>
    %44 = tpu.matmul %43, %42, %cst_22 {dimension_numbers = #tpu.dot_dimension_numbers<[0], [0], [1], [1], [0, 1, 1, 1], [], []>} : vector<32x16xbf16>, vector<32x256xbf16>, vector<16x256xf32> -> vector<16x256xf32>
    %cst_23 = arith.constant dense<0xFF800000> : vector<256xf32>
    %45 = vector.multi_reduction <maximumf>, %44, %cst_23 [0] : vector<16x256xf32> to vector<256xf32>
    %46 = vector.shape_cast %45 : vector<256xf32> to vector<1x256xf32>
    %47 = vector.broadcast %46 : vector<1x256xf32> to vector<16x256xf32>
    %48 = arith.subf %44, %47 : vector<16x256xf32>
    %49 = math.exp %48 : vector<16x256xf32>
    %cst_24 = arith.constant dense<0.000000e+00> : vector<256xf32>
    %50 = vector.multi_reduction <add>, %49, %cst_24 [0] : vector<16x256xf32> to vector<256xf32>
    %51 = vector.shape_cast %50 : vector<256xf32> to vector<1x256xf32>
    %52 = tpu.reciprocal %51 : vector<1x256xf32> -> vector<1x256xf32>
    %53 = vector.broadcast %52 : vector<1x256xf32> to vector<16x256xf32>
    %54 = arith.mulf %49, %53 : vector<16x256xf32>
    %cst_25 = arith.constant dense<0.000000e+00> : vector<16xf32>
    %55 = vector.multi_reduction <add>, %54, %cst_25 [1] : vector<16x256xf32> to vector<16xf32>
    %56 = vector.shape_cast %55 : vector<16xf32> to vector<16x1xf32>
    %cst_26 = arith.constant 9.99999997E-7 : f32
    %57 = vector.broadcast %cst_26 : f32 to vector<16x1xf32>
    %58 = arith.addf %57, %56 : vector<16x1xf32>
    %59 = tpu.reciprocal %58 : vector<16x1xf32> -> vector<16x1xf32>
    %60 = vector.broadcast %59 : vector<16x1xf32> to vector<16x256xf32>
    %61 = arith.mulf %54, %60 : vector<16x256xf32>
    %62 = arith.truncf %61 : vector<16x256xf32> to vector<16x256xbf16>
    %cst_27 = arith.constant dense<0.000000e+00> : vector<32x16xf32>
    %63 = tpu.matmul %42, %62, %cst_27 {dimension_numbers = #tpu.dot_dimension_numbers<[1], [1], [0], [0], [0, 0, 1, 0], [], []>} : vector<32x256xbf16>, vector<16x256xbf16>, vector<32x16xf32> -> vector<32x16xf32>
    %64 = arith.mulf %63, %63 : vector<32x16xf32>
    %cst_28 = arith.constant dense<0.000000e+00> : vector<16xf32>
    %65 = vector.multi_reduction <add>, %64, %cst_28 [0] : vector<32x16xf32> to vector<16xf32>
    %66 = vector.shape_cast %65 : vector<16xf32> to vector<1x16xf32>
    %cst_29 = arith.constant 9.99999996E-13 : f32
    %67 = vector.broadcast %cst_29 : f32 to vector<1x16xf32>
    %68 = arith.addf %66, %67 : vector<1x16xf32>
    %69 = math.rsqrt %68 : vector<1x16xf32>
    %70 = vector.broadcast %69 : vector<1x16xf32> to vector<32x16xf32>
    %71 = arith.mulf %63, %70 : vector<32x16xf32>
    %c0_30 = arith.constant 0 : index
    %c0_31 = arith.constant 0 : index
    %72 = vector.load %arg9[%c0_30, %c0_31] : memref<32x256xbf16, #tpu.memory_space<vmem>>, vector<32x256xbf16>
    %73 = arith.truncf %71 : vector<32x16xf32> to vector<32x16xbf16>
    %cst_32 = arith.constant dense<0.000000e+00> : vector<16x256xf32>
    %74 = tpu.matmul %73, %72, %cst_32 {dimension_numbers = #tpu.dot_dimension_numbers<[0], [0], [1], [1], [0, 1, 1, 1], [], []>} : vector<32x16xbf16>, vector<32x256xbf16>, vector<16x256xf32> -> vector<16x256xf32>
    %cst_33 = arith.constant dense<0xFF800000> : vector<256xf32>
    %75 = vector.multi_reduction <maximumf>, %74, %cst_33 [0] : vector<16x256xf32> to vector<256xf32>
    %76 = vector.shape_cast %75 : vector<256xf32> to vector<1x256xf32>
    %77 = vector.broadcast %76 : vector<1x256xf32> to vector<16x256xf32>
    %78 = arith.subf %74, %77 : vector<16x256xf32>
    %79 = math.exp %78 : vector<16x256xf32>
    %cst_34 = arith.constant dense<0.000000e+00> : vector<256xf32>
    %80 = vector.multi_reduction <add>, %79, %cst_34 [0] : vector<16x256xf32> to vector<256xf32>
    %81 = vector.shape_cast %80 : vector<256xf32> to vector<1x256xf32>
    %82 = tpu.reciprocal %81 : vector<1x256xf32> -> vector<1x256xf32>
    %83 = vector.broadcast %82 : vector<1x256xf32> to vector<16x256xf32>
    %84 = arith.mulf %79, %83 : vector<16x256xf32>
    %cst_35 = arith.constant dense<0.000000e+00> : vector<16xf32>
    %85 = vector.multi_reduction <add>, %84, %cst_35 [1] : vector<16x256xf32> to vector<16xf32>
    %86 = vector.shape_cast %85 : vector<16xf32> to vector<16x1xf32>
    %cst_36 = arith.constant 9.99999997E-7 : f32
    %87 = vector.broadcast %cst_36 : f32 to vector<16x1xf32>
    %88 = arith.addf %87, %86 : vector<16x1xf32>
    %89 = tpu.reciprocal %88 : vector<16x1xf32> -> vector<16x1xf32>
    %90 = vector.broadcast %89 : vector<16x1xf32> to vector<16x256xf32>
    %91 = arith.mulf %84, %90 : vector<16x256xf32>
    %92 = arith.truncf %91 : vector<16x256xf32> to vector<16x256xbf16>
    %cst_37 = arith.constant dense<0.000000e+00> : vector<32x16xf32>
    %93 = tpu.matmul %72, %92, %cst_37 {dimension_numbers = #tpu.dot_dimension_numbers<[1], [1], [0], [0], [0, 0, 1, 0], [], []>} : vector<32x256xbf16>, vector<16x256xbf16>, vector<32x16xf32> -> vector<32x16xf32>
    %94 = arith.mulf %93, %93 : vector<32x16xf32>
    %cst_38 = arith.constant dense<0.000000e+00> : vector<16xf32>
    %95 = vector.multi_reduction <add>, %94, %cst_38 [0] : vector<32x16xf32> to vector<16xf32>
    %96 = vector.shape_cast %95 : vector<16xf32> to vector<1x16xf32>
    %cst_39 = arith.constant 9.99999996E-13 : f32
    %97 = vector.broadcast %cst_39 : f32 to vector<1x16xf32>
    %98 = arith.addf %96, %97 : vector<1x16xf32>
    %99 = math.rsqrt %98 : vector<1x16xf32>
    %100 = vector.broadcast %99 : vector<1x16xf32> to vector<32x16xf32>
    %101 = arith.mulf %93, %100 : vector<32x16xf32>
    %c0_40 = arith.constant 0 : index
    %c0_41 = arith.constant 0 : index
    %c0_42 = arith.constant 0 : index
    %102 = vector.load %arg8[%c0_40, %c0_41, %c0_42] : memref<1x32x16xf32, #tpu.memory_space<vmem>>, vector<1x32x16xf32>
    %103 = vector.shape_cast %102 : vector<1x32x16xf32> to vector<32x16xf32>
    %104 = vector.shape_cast %101 : vector<32x16xf32> to vector<1x32x16xf32>
    tpu.vector_store %arg8[%c0_40, %c0_41, %c0_42], %104 {strides = array<i32>} : memref<1x32x16xf32, #tpu.memory_space<vmem>>, vector<1x32x16xf32>,
    %105 = arith.truncf %101 : vector<32x16xf32> to vector<32x16xbf16>
    %106 = arith.truncf %84 : vector<16x256xf32> to vector<16x256xbf16>
    %cst_43 = arith.constant dense<0.000000e+00> : vector<32x256xf32>
    %107 = tpu.matmul %105, %106, %cst_43 {dimension_numbers = #tpu.dot_dimension_numbers<[1], [0], [0], [1], [0, 0, 1, 1], [], []>} : vector<32x16xbf16>, vector<16x256xbf16>, vector<32x256xf32> -> vector<32x256xf32>
    %cst_44 = arith.constant 0.000000e+00 : f32
    %108 = vector.broadcast %cst_44 : f32 to vector<32x256xf32>
    %109 = arith.maximumf %107, %108 : vector<32x256xf32>
    %110 = arith.truncf %109 : vector<32x256xf32> to vector<32x256xbf16>
    %c0_45 = arith.constant 0 : index
    %c0_46 = arith.constant 0 : index
    %111 = vector.load %arg5[%c0_45, %c0_46] : memref<32x32xf32, #tpu.memory_space<vmem>>, vector<32x32xf32>
    %112 = arith.truncf %111 : vector<32x32xf32> to vector<32x32xbf16>
    %cst_47 = arith.constant dense<0.000000e+00> : vector<32x256xf32>
    %113 = tpu.matmul %112, %110, %cst_47 {dimension_numbers = #tpu.dot_dimension_numbers<[1], [0], [0], [1], [0, 0, 1, 1], [], []>} : vector<32x32xbf16>, vector<32x256xbf16>, vector<32x256xf32> -> vector<32x256xf32>
    %c0_48 = arith.constant 0 : index
    %c0_49 = arith.constant 0 : index
    %114 = vector.load %arg6[%c0_48, %c0_49] : memref<32x1xf32, #tpu.memory_space<vmem>>, vector<32x1xf32>
    %115 = vector.broadcast %114 : vector<32x1xf32> to vector<32x256xf32>
    %116 = arith.addf %113, %115 : vector<32x256xf32>
    %c0_50 = arith.constant 0 : index
    %c0_51 = arith.constant 0 : index
    %c0_52 = arith.constant 0 : index
    %117 = vector.load %arg1[%c0_50, %c0_51, %c0_52] : memref<1x32x256xf32, #tpu.memory_space<vmem>>, vector<1x32x256xf32>
    %118 = vector.shape_cast %117 : vector<1x32x256xf32> to vector<32x256xf32>
    %119 = arith.addf %116, %118 : vector<32x256xf32>
    %cst_53 = arith.constant 0.000000e+00 : f32
    %120 = vector.broadcast %cst_53 : f32 to vector<32x256xf32>
    %121 = arith.maximumf %119, %120 : vector<32x256xf32>
    %c0_54 = arith.constant 0 : index
    %c0_55 = arith.constant 0 : index
    %c0_56 = arith.constant 0 : index
    %122 = vector.load %arg7[%c0_54, %c0_55, %c0_56] : memref<1x32x256xf32, #tpu.memory_space<vmem>>, vector<1x32x256xf32>
    %123 = vector.shape_cast %122 : vector<1x32x256xf32> to vector<32x256xf32>
    %124 = vector.shape_cast %121 : vector<32x256xf32> to vector<1x32x256xf32>
    tpu.vector_store %arg7[%c0_54, %c0_55, %c0_56], %124 {strides = array<i32>} : memref<1x32x256xf32, #tpu.memory_space<vmem>>, vector<1x32x256xf32>,
    return
  }
  func.func @transform_0(%arg0: i32) -> (i32, i32, i32) {
    %c0_i32 = arith.constant 0 : i32
    %c0_i32_0 = arith.constant 0 : i32
    %c0_i32_1 = arith.constant 0 : i32
    return %arg0, %c0_i32, %c0_i32_0 : i32, i32, i32
  }
  func.func @transform_1(%arg0: i32) -> (i32, i32) {
    %c0_i32 = arith.constant 0 : i32
    %c0_i32_0 = arith.constant 0 : i32
    %c0_i32_1 = arith.constant 0 : i32
    return %c0_i32, %c0_i32_0 : i32, i32
  }
  func.func @transform_2(%arg0: i32) -> (i32, i32) {
    %c0_i32 = arith.constant 0 : i32
    %c0_i32_0 = arith.constant 0 : i32
    %c0_i32_1 = arith.constant 0 : i32
    return %c0_i32, %c0_i32_0 : i32, i32
  }
  func.func @transform_3(%arg0: i32) -> (i32, i32) {
    %c0_i32 = arith.constant 0 : i32
    %c0_i32_0 = arith.constant 0 : i32
    %c0_i32_1 = arith.constant 0 : i32
    return %c0_i32, %c0_i32_0 : i32, i32
  }
  func.func @transform_4(%arg0: i32) -> (i32, i32) {
    %c0_i32 = arith.constant 0 : i32
    %c0_i32_0 = arith.constant 0 : i32
    %c0_i32_1 = arith.constant 0 : i32
    return %c0_i32, %c0_i32_0 : i32, i32
  }
  func.func @transform_5(%arg0: i32) -> (i32, i32) {
    %c0_i32 = arith.constant 0 : i32
    %c0_i32_0 = arith.constant 0 : i32
    %c0_i32_1 = arith.constant 0 : i32
    return %c0_i32, %c0_i32_0 : i32, i32
  }
  func.func @transform_6(%arg0: i32) -> (i32, i32, i32) {
    %c0_i32 = arith.constant 0 : i32
    %c0_i32_0 = arith.constant 0 : i32
    %c0_i32_1 = arith.constant 0 : i32
    return %arg0, %c0_i32, %c0_i32_0 : i32, i32, i32
  }
  func.func @transform_7(%arg0: i32) -> (i32, i32, i32) {
    %c0_i32 = arith.constant 0 : i32
    %c0_i32_0 = arith.constant 0 : i32
    %c0_i32_1 = arith.constant 0 : i32
    return %arg0, %c0_i32, %c0_i32_0 : i32, i32, i32
  }
}

</mosaic_0001>

<llo_original>
// kernel: tpu_custom_call.1
$region0: #{tpu_custom_call.1}
  #allocation0 [shape = 'u32[]', space=smem, size = 0x4, offset = 0x4, fixed_abs, tag = 'smem constant byte address 0x4 - core index']
  #allocation1 [shape = 'u32[144,128]{1,0:T(1,128)}', space=vmem, size = 0x12000, scoped, tag = 'internal scratch']
  #allocation2 [shape = 'bf16[32,256]{1,0:T(8,128)(2,1)}', space=vmem, size = 0x4000, scoped, tag = 'scratch operand']
  %s0 = inlined_call_operand.hbm [shape: f32[4,32,256], index: 0, kind: input, shape index: {}]
  %s1 = inlined_call_operand.vmem [shape: f32[32,32], index: 1, kind: input, shape index: {}]
  %s2 = inlined_call_operand.vmem [shape: f32[32,1], index: 2, kind: input, shape index: {}]
  %s3 = inlined_call_operand.vmem [shape: f32[32,16], index: 3, kind: input, shape index: {}]
  %s4 = inlined_call_operand.vmem [shape: f32[32,32], index: 4, kind: input, shape index: {}]
  %s5 = inlined_call_operand.vmem [shape: f32[32,1], index: 5, kind: input, shape index: {}]
  %s6 = inlined_call_operand.hbm [shape: f32[4,32,256], index: 6, kind: output, shape index: {0}]
  %s7 = inlined_call_operand.vmem [shape: f32[4,32,16], index: 7, kind: output, shape index: {1}]
  %8 = xla_tuple %s6, %s7
  %s9 = sld [smem:[#allocation0]]
  $region69: #{tpu_custom_call.1} parent=0
    _
  %s11 = ssub.s32 1, %s9
  %s12 = scalar_select 0, %s11, %s9
  $region1: #{tpu_custom_call.1} parent=0
    #allocation3 [shape = 'u8[65536]{0}', space=vmem, size = 0x10000, scoped, tag = 'input window, operand 0']
    #allocation4 [shape = 's32[2]{0}', space=sflag, size = 0x8, scoped, tag = 'scoped memory for tpu_custom_call.1']
    #allocation5 [shape = 's32[2]{0}', space=sflag, size = 0x8, scoped, tag = 'scoped memory for tpu_custom_call.1']
    #allocation6 [shape = 'u8[65536]{0}', space=vmem, size = 0x10000, scoped, tag = 'output window, operand 0']
    %13 = vsyncpa [#allocation4], 0
    %s14 = scalar_lea.sflag [#allocation4], 1
    %15 = vsyncpa %s14, 0
    %16 = vsyncpa [#allocation5], 0
    %s17 = scalar_lea.sflag [#allocation5], 1
    %18 = vsyncpa %s17, 0
    loop: start=0, step=1, limit=6
    $region2: #{tpu_custom_call.1} parent=1 // loop_pre_header
      _
    $region3: #{tpu_custom_call.1} parent=1 // loop_header
      %s20 = sphi 0, %s24
      %p21 = scmp.ge.s32.totalorder %s20, 6
      %s30 = sphi 0, %s32
      %s33 = sphi 0, %s30
      %s34 = sphi 0, %s33
      %s50 = sphi 0, %s34
      %s54 = sphi 0, %s54
      %s56 = sphi 0, %s54
      %s57 = sphi 0, %s56
      %s71 = sphi 0, %s57
      %s75 = sphi 0, %s75
      %s77 = sphi 0, %s75
      %s78 = sphi 0, %s77
      %s92 = sphi 0, %s78
      %s96 = sphi 0, %s96
      %s98 = sphi 0, %s96
      %s99 = sphi 0, %s98
      %s113 = sphi 0, %s99
      %s117 = sphi 0, %s117
      %s119 = sphi 0, %s117
      %s120 = sphi 0, %s119
      %s134 = sphi 0, %s120
      %s138 = sphi 0, %s138
      %s140 = sphi 0, %s138
      %s141 = sphi 0, %s140
      %s155 = sphi 0, %s141
      %s161 = sphi 0, %s163
      %s164 = sphi 0, %s161
      %s165 = sphi 0, %s164
      %s181 = sphi 0, %s165
      %s187 = sphi 0, %s189
      %s190 = sphi 0, %s187
      %s191 = sphi 0, %s190
      %s207 = sphi 0, %s191
    $region4: #{tpu_custom_call.1} parent=1 // loop_header_branch
      %23 = sbr.rel (%p21) target = $region8
    $region5: #{tpu_custom_call.1} parent=1 // loop_body
      %s25 = ssub.s32 %s20, 1
      %s26 = ssub.s32 %s20, 2
      %s27 = sadd.s32 %s20, 1
      %s28 = ssub.s32 %s20, %s27
      %p29 = scmp.eq.s32.totalorder %s28, 0
      %s31 = sadd.s32 %s30, 1
      %s32 = scalar_select %p29, %s30, %s31
      %p35 = pneg %p29
      %p36 = scmp.eq.s32.totalorder %s20, 3
      %p37 = por %p35, %p36
      %p38 = scmp.ne.s32.totalorder %s30, %s33
      %p39 = scmp.eq.s32.totalorder %s20, 0
      %p40 = por %p38, %p39
      %p41 = scmp.ne.s32.totalorder %s30, %s33
      %p42 = scmp.eq.s32.totalorder %s25, 3
      %p43 = por %p41, %p42
      %p44 = scmp.ne.s32.totalorder %s33, %s34
      %p45 = scmp.eq.s32.totalorder %s25, 0
      %p46 = por %p44, %p45
      %p47 = scmp.ne.s32.totalorder %s33, %s34
      %p48 = scmp.eq.s32.totalorder %s26, 3
      %p49 = por %p47, %p48
      %p51 = scmp.ne.s32.totalorder %s34, %s50
      %p52 = scmp.eq.s32.totalorder %s26, 0
      %p53 = por %p51, %p52
      %s55 = sadd.s32 %s54, 1
      %p58 = scmp.eq.s32.totalorder %s20, 3
      %p59 = scmp.ne.s32.totalorder %s54, %s56
      %p60 = scmp.eq.s32.totalorder %s20, 0
      %p61 = por %p59, %p60
      %p62 = scmp.ne.s32.totalorder %s54, %s56
      %p63 = scmp.eq.s32.totalorder %s25, 3
      %p64 = por %p62, %p63
      %p65 = scmp.ne.s32.totalorder %s56, %s57
      %p66 = scmp.eq.s32.totalorder %s25, 0
      %p67 = por %p65, %p66
      %p68 = scmp.ne.s32.totalorder %s56, %s57
      %p69 = scmp.eq.s32.totalorder %s26, 3
      %p70 = por %p68, %p69
      %p72 = scmp.ne.s32.totalorder %s57, %s71
      %p73 = scmp.eq.s32.totalorder %s26, 0
      %p74 = por %p72, %p73
      %s76 = sadd.s32 %s75, 1
      %p79 = scmp.eq.s32.totalorder %s20, 3
      %p80 = scmp.ne.s32.totalorder %s75, %s77
      %p81 = scmp.eq.s32.totalorder %s20, 0
      %p82 = por %p80, %p81
      %p83 = scmp.ne.s32.totalorder %s75, %s77
      %p84 = scmp.eq.s32.totalorder %s25, 3
      %p85 = por %p83, %p84
      %p86 = scmp.ne.s32.totalorder %s77, %s78
      %p87 = scmp.eq.s32.totalorder %s25, 0
      %p88 = por %p86, %p87
      %p89 = scmp.ne.s32.totalorder %s77, %s78
      %p90 = scmp.eq.s32.totalorder %s26, 3
      %p91 = por %p89, %p90
      %p93 = scmp.ne.s32.totalorder %s78, %s92
      %p94 = scmp.eq.s32.totalorder %s26, 0
      %p95 = por %p93, %p94
      %s97 = sadd.s32 %s96, 1
      %p100 = scmp.eq.s32.totalorder %s20, 3
      %p101 = scmp.ne.s32.totalorder %s96, %s98
      %p102 = scmp.eq.s32.totalorder %s20, 0
      %p103 = por %p101, %p102
      %p104 = scmp.ne.s32.totalorder %s96, %s98
      %p105 = scmp.eq.s32.totalorder %s25, 3
      %p106 = por %p104, %p105
      %p107 = scmp.ne.s32.totalorder %s98, %s99
      %p108 = scmp.eq.s32.totalorder %s25, 0
      %p109 = por %p107, %p108
      %p110 = scmp.ne.s32.totalorder %s98, %s99
      %p111 = scmp.eq.s32.totalorder %s26, 3
      %p112 = por %p110, %p111
      %p114 = scmp.ne.s32.totalorder %s99, %s113
      %p115 = scmp.eq.s32.totalorder %s26, 0
      %p116 = por %p114, %p115
      %s118 = sadd.s32 %s117, 1
      %p121 = scmp.eq.s32.totalorder %s20, 3
      %p122 = scmp.ne.s32.totalorder %s117, %s119
      %p123 = scmp.eq.s32.totalorder %s20, 0
      %p124 = por %p122, %p123
      %p125 = scmp.ne.s32.totalorder %s117, %s119
      %p126 = scmp.eq.s32.totalorder %s25, 3
      %p127 = por %p125, %p126
      %p128 = scmp.ne.s32.totalorder %s119, %s120
      %p129 = scmp.eq.s32.totalorder %s25, 0
      %p130 = por %p128, %p129
      %p131 = scmp.ne.s32.totalorder %s119, %s120
      %p132 = scmp.eq.s32.totalorder %s26, 3
      %p133 = por %p131, %p132
      %p135 = scmp.ne.s32.totalorder %s120, %s134
      %p136 = scmp.eq.s32.totalorder %s26, 0
      %p137 = por %p135, %p136
      %s139 = sadd.s32 %s138, 1
      %p142 = scmp.eq.s32.totalorder %s20, 3
      %p143 = scmp.ne.s32.totalorder %s138, %s140
      %p144 = scmp.eq.s32.totalorder %s20, 0
      %p145 = por %p143, %p144
      %p146 = scmp.ne.s32.totalorder %s138, %s140
      %p147 = scmp.eq.s32.totalorder %s25, 3
      %p148 = por %p146, %p147
      %p149 = scmp.ne.s32.totalorder %s140, %s141
      %p150 = scmp.eq.s32.totalorder %s25, 0
      %p151 = por %p149, %p150
      %p152 = scmp.ne.s32.totalorder %s140, %s141
      %p153 = scmp.eq.s32.totalorder %s26, 3
      %p154 = por %p152, %p153
      %p156 = scmp.ne.s32.totalorder %s141, %s155
      %p157 = scmp.eq.s32.totalorder %s26, 0
      %p158 = por %p156, %p157
      %s159 = ssub.s32 %s20, %s27
      %p160 = scmp.eq.s32.totalorder %s159, 0
      %s162 = sadd.s32 %s161, 1
      %s163 = scalar_select %p160, %s161, %s162
      %p166 = pneg %p160
      %p167 = scmp.eq.s32.totalorder %s20, 3
      %p168 = por %p166, %p167
      %p169 = scmp.ne.s32.totalorder %s161, %s164
      %p170 = scmp.eq.s32.totalorder %s20, 0
      %p171 = por %p169, %p170
      %p172 = scmp.ne.s32.totalorder %s161, %s164
      %p173 = scmp.eq.s32.totalorder %s25, 3
      %p174 = por %p172, %p173
      %p175 = scmp.ne.s32.totalorder %s164, %s165
      %p176 = scmp.eq.s32.totalorder %s25, 0
      %p177 = por %p175, %p176
      %p178 = scmp.ne.s32.totalorder %s164, %s165
      %p179 = scmp.eq.s32.totalorder %s26, 3
      %p180 = por %p178, %p179
      %p182 = scmp.ne.s32.totalorder %s165, %s181
      %p183 = scmp.eq.s32.totalorder %s26, 0
      %p184 = por %p182, %p183
      %s185 = ssub.s32 %s20, %s27
      %p186 = scmp.eq.s32.totalorder %s185, 0
      %s188 = sadd.s32 %s187, 1
      %s189 = scalar_select %p186, %s187, %s188
      %p192 = pneg %p186
      %p193 = scmp.eq.s32.totalorder %s20, 3
      %p194 = por %p192, %p193
      %p195 = scmp.ne.s32.totalorder %s187, %s190
      %p196 = scmp.eq.s32.totalorder %s20, 0
      %p197 = por %p195, %p196
      %p198 = scmp.ne.s32.totalorder %s187, %s190
      %p199 = scmp.eq.s32.totalorder %s25, 3
      %p200 = por %p198, %p199
      %p201 = scmp.ne.s32.totalorder %s190, %s191
      %p202 = scmp.eq.s32.totalorder %s25, 0
      %p203 = por %p201, %p202
      %p204 = scmp.ne.s32.totalorder %s190, %s191
      %p205 = scmp.eq.s32.totalorder %s26, 3
      %p206 = por %p204, %p205
      %p208 = scmp.ne.s32.totalorder %s191, %s207
      %p209 = scmp.eq.s32.totalorder %s26, 0
      %p210 = por %p208, %p209
      %p211 = scmp.le.s32.totalorder 1, %s20
      %p212 = scmp.lt.s32.totalorder %s20, 5
      %p213 = pnand %p211, %p212
      %p214 = pneg %p213
      // Predicated region
      $region9: #{tpu_custom_call.1} parent=5 // pred_check
        _
      $region10: #{tpu_custom_call.1} parent=5 // pred_check_branch
        %216 = sbr.rel (%p213) target = $region12
      $region11: #{tpu_custom_call.1} parent=5 // pred_region
        %s217 = ssub.s32 %s20, 1
        // Predicated region
        $region13: #{tpu_custom_call.1} parent=11 // pred_check
          %p218 = pneg %p67
        $region14: #{tpu_custom_call.1} parent=11 // pred_check_branch
          %220 = sbr.rel (%p218) target = $region16
        $region15: #{tpu_custom_call.1} parent=11 // pred_region
          _
        $region16: #{tpu_custom_call.1} parent=11 // pred_fallthru
          _
        // Predicated region
        $region17: #{tpu_custom_call.1} parent=11 // pred_check
          %p221 = pneg %p88
        $region18: #{tpu_custom_call.1} parent=11 // pred_check_branch
          %223 = sbr.rel (%p221) target = $region20
        $region19: #{tpu_custom_call.1} parent=11 // pred_region
          _
        $region20: #{tpu_custom_call.1} parent=11 // pred_fallthru
          _
        // Predicated region
        $region21: #{tpu_custom_call.1} parent=11 // pred_check
          %p224 = pneg %p109
        $region22: #{tpu_custom_call.1} parent=11 // pred_check_branch
          %226 = sbr.rel (%p224) target = $region24
        $region23: #{tpu_custom_call.1} parent=11 // pred_region
          _
        $region24: #{tpu_custom_call.1} parent=11 // pred_fallthru
          _
        // Predicated region
        $region25: #{tpu_custom_call.1} parent=11 // pred_check
          %p227 = pneg %p130
        $region26: #{tpu_custom_call.1} parent=11 // pred_check_branch
          %229 = sbr.rel (%p227) target = $region28
        $region27: #{tpu_custom_call.1} parent=11 // pred_region
          _
        $region28: #{tpu_custom_call.1} parent=11 // pred_fallthru
          _
        // Predicated region
        $region29: #{tpu_custom_call.1} parent=11 // pred_check
          %p230 = pneg %p151
        $region30: #{tpu_custom_call.1} parent=11 // pred_check_branch
          %232 = sbr.rel (%p230) target = $region32
        $region31: #{tpu_custom_call.1} parent=11 // pred_region
          _
        $region32: #{tpu_custom_call.1} parent=11 // pred_fallthru
          _
      $region12: #{tpu_custom_call.1} parent=5 // pred_fallthru
        _
      %p233 = scmp.lt.s32.totalorder %s20, 4
      // Predicated region
      $region33: #{tpu_custom_call.1} parent=5 // pred_check
        %p234 = pneg %p233
      $region34: #{tpu_custom_call.1} parent=5 // pred_check_branch
        %236 = sbr.rel (%p234) target = $region36
      $region35: #{tpu_custom_call.1} parent=5 // pred_region
        // Predicated region
        $region37: #{tpu_custom_call.1} parent=35 // pred_check
          %p237 = pneg %p40
        $region38: #{tpu_custom_call.1} parent=35 // pred_check_branch
          %239 = sbr.rel (%p237) target = $region40
        $region39: #{tpu_custom_call.1} parent=35 // pred_region
          %s240 = sand.u32 %s30, 1
          %s241 = scalar_lea.sflag [#allocation4], %s240
          %s242 = sand.u32 %s30, 1
          %s243 = smul.addr %s242, 64
          %s244 = scalar_lea.vmem [#allocation3], %s243
          %s246 = ssub.s32 1024, 1024
          %247 = vsyncadd %s241, %s246
          %s248 = smul.addr %s20, 8
          %s249 = smul.addr %s248, 128
          %s250 = scalar_lea.hbm %s0, %s249
          %s251 = sshll.u32 %s244, 4
          %s252 = int_to_ptr.vmem [resolvable:$true] %s251
          %257 = dma.hbm_to_vmem [thread:$0]  %s250, 1024, %s252, %s241, 256, 256, 16
        $region40: #{tpu_custom_call.1} parent=35 // pred_fallthru
          _
      $region36: #{tpu_custom_call.1} parent=5 // pred_fallthru
        _
      %p258 = scmp.le.s32.totalorder 1, %s20
      %p259 = scmp.lt.s32.totalorder %s20, 5
      %p260 = pnand %p258, %p259
      %p261 = pneg %p260
      // Predicated region
      $region41: #{tpu_custom_call.1} parent=5 // pred_check
        _
      $region42: #{tpu_custom_call.1} parent=5 // pred_check_branch
        %263 = sbr.rel (%p260) target = $region44
      $region43: #{tpu_custom_call.1} parent=5 // pred_region
        %s264 = ssub.s32 %s20, 1
        %s265 = sand.u32 %s33, 1
        %s266 = scalar_lea.sflag [#allocation4], %s265
        %s267 = sand.u32 %s33, 1
        %s268 = smul.addr %s267, 64
        %s269 = scalar_lea.vmem [#allocation3], %s268
        // Predicated region
        $region45: #{tpu_custom_call.1} parent=43 // pred_check
          %p270 = pneg %p46
        $region46: #{tpu_custom_call.1} parent=43 // pred_check_branch
          %272 = sbr.rel (%p270) target = $region48
        $region47: #{tpu_custom_call.1} parent=43 // pred_region
          %273 = dma.done %s266, 1024
        $region48: #{tpu_custom_call.1} parent=43 // pred_fallthru
          _
        %s274 = sand.u32 %s33, 1
        %s275 = scalar_lea.sflag [#allocation4], %s274
        %s276 = sand.u32 %s33, 1
        %s277 = smul.addr %s276, 64
        %s278 = scalar_lea.vmem [#allocation3], %s277
        %p279 = pneg %p46
        %p280 = pneg %p43
        %p281 = pneg %p67
        %p282 = pneg %p64
        %p283 = pneg %p88
        %p284 = pneg %p85
        %p285 = pneg %p109
        %p286 = pneg %p106
        %p287 = pneg %p130
        %p288 = pneg %p127
        %p289 = pneg %p151
        %p290 = pneg %p148
        %p291 = pneg %p177
        %p292 = pneg %p174
        %s293 = sand.u32 %s164, 1
        %s294 = scalar_lea.sflag [#allocation5], %s293
        %s295 = sand.u32 %s164, 1
        %s296 = smul.addr %s295, 64
        %s297 = scalar_lea.vmem [#allocation6], %s296
        %p298 = pneg %p203
        %p299 = pneg %p200
        %p300 = scmp.lt.s32.totalorder %s25, 3
        %s301 = scalar_select %p300, %s25, 3
        %s302 = smul.addr %s301, 4
        %s303 = smul.addr %s302, 8
        %s304 = scalar_lea.vmem %s7, %s303
        %p305 = scmp.lt.s32.totalorder %s25, 3
        %s306 = scalar_select %p305, %s25, 3
        %s307 = smul.addr %s306, 4
        %s308 = smul.addr %s307, 8
        %s309 = scalar_lea.vmem %s7, %s308
        %v311 = vld [vmem:[%s1] sm:$0xff]
        %v312 = vld [vmem:[%s1 + $0x8] sm:$0xff]
        %v313 = vld [vmem:[%s1 + $0x10] sm:$0xff]
        %v314 = vld [vmem:[%s1 + $0x18] sm:$0xff]
        %v315 = vpack.c.bf16 %v312, %v311
        %v316 = vpack.c.bf16 %v314, %v313
        %v317 = vld [vmem:[%s269] sm:$0xff]
        %v318 = vld [vmem:[%s269 + $0x8] sm:$0xff]
        %v319 = vld [vmem:[%s269 + $0x10] sm:$0xff]
        %v320 = vld [vmem:[%s269 + $0x18] sm:$0xff]
        %v321 = vld [vmem:[%s269 + $0x20] sm:$0xff]
        %v322 = vld [vmem:[%s269 + $0x28] sm:$0xff]
        %v323 = vld [vmem:[%s269 + $0x30] sm:$0xff]
        %v324 = vld [vmem:[%s269 + $0x38] sm:$0xff]
        %v325 = vpack.c.bf16 %v319, %v317
        %v326 = vpack.c.bf16 %v320, %v318
        %v327 = vpack.c.bf16 %v323, %v321
        %v328 = vpack.c.bf16 %v324, %v322
        %v329 = vld [vmem:[%s2] sm:$0xff]
        %v330 = vld [vmem:[%s2 + $0x8] sm:$0xff]
        %v331 = vld [vmem:[%s2 + $0x10] sm:$0xff]
        %v332 = vld [vmem:[%s2 + $0x18] sm:$0xff]
        %334 = vset.pattern.permute.xlu0 0
        %335 = vperm.xlu0 %334, %v329
        %v336 = vpop.permute.xlu0 %335
        %339 = vset.pattern.permute.xlu0 0
        %340 = vperm.xlu0 %339, %v330
        %v341 = vpop.permute.xlu0 %340
        %344 = vset.pattern.permute.xlu0 0
        %345 = vperm.xlu0 %344, %v331
        %v346 = vpop.permute.xlu0 %345
        %349 = vset.pattern.permute.xlu0 0
        %350 = vperm.xlu0 %349, %v332
        %v351 = vpop.permute.xlu0 %350
        %vm353 = vcmask 261120
        %v355 = vsel %vm353, %v315, 0
        %v358 = vsel %vm353, %v316, 0
        %360 = vmatprep.subr.bf16.mxu0 0
        %361 = vmatpush1.bf16.msra.mxu0 0
        %362 = vmatprep.subr.bf16.mxu0 0
        %363 = vmatpush1.bf16.msra.mxu0 0
        %364 = vmatprep.subr.bf16.mxu0 0
        %365 = vmatpush1.bf16.msra.mxu0 0
        %366 = vmatprep.subr.bf16.mxu0 0
        %367 = vmatpush1.bf16.msra.mxu0 0
        %368 = vmatprep.subr.bf16.mxu0 0
        %369 = vmatpush1.bf16.msra.mxu0 0
        %370 = vmatprep.subr.bf16.mxu0 0
        %371 = vmatpush1.bf16.msra.mxu0 0
        %372 = vmatprep.subr.bf16.mxu0 %v328
        %373 = vmatpush1.bf16.msra.mxu0 %v327
        %374 = vmatprep.subr.bf16.mxu0 %v326
        %375 = vmatpush1.bf16.msra.mxu0 %v325
        %376 = vmatprep.subr.bf16.mxu0 0
        %377 = vmatpush2.bf16.msra.mxu0 0
        %378 = vmatprep.subr.bf16.mxu0 0
        %379 = vmatpush2.bf16.msra.mxu0 0
        %380 = vmatprep.subr.bf16.mxu0 0
        %381 = vmatpush2.bf16.msra.mxu0 0
        %382 = vmatprep.subr.bf16.mxu0 0
        %383 = vmatpush2.bf16.msra.mxu0 0
        %384 = vmatprep.subr.bf16.mxu0 0
        %385 = vmatpush2.bf16.msra.mxu0 0
        %386 = vmatprep.subr.bf16.mxu0 0
        %387 = vmatpush2.bf16.msra.mxu0 0
        %388 = vmatprep.subr.bf16.mxu0 0
        %389 = vmatpush2.bf16.msra.mxu0 0
        %390 = vmatprep.subr.bf16.mxu0 0
        %391 = vmatpush2.bf16.msra.mxu0 0
        %392 = vmatprep.mubr.bf16.mxu0 0
        %393 = vmatmul.mubr.bf16.gmra.mxu0 %v355
        %v394 = vpop.f32.mrf.mxu0
        %v395 = vadd.f32 %v336, %v394
        %v396 = vpop.f32.mrf.mxu0
        %v397 = vadd.f32 %v336, %v396
        %v398 = vpop.f32.mrf.mxu0
        %v399 = vadd.f32 %v341, %v398
        %v400 = vpop.f32.mrf.mxu0
        %v401 = vadd.f32 %v341, %v400
        %402 = vmatprep.mubr.bf16.mxu0 0
        %403 = vmatmul.mubr.bf16.gmra.mxu0 %v358
        %v404 = vpop.f32.mrf.mxu0
        %v405 = vadd.f32 %v346, %v404
        %v406 = vpop.f32.mrf.mxu0
        %v407 = vadd.f32 %v346, %v406
        %v408 = vpop.f32.mrf.mxu0
        %v409 = vadd.f32 %v351, %v408
        %v410 = vpop.f32.mrf.mxu0
        %v411 = vadd.f32 %v351, %v410
        %412 = vdwg.mxu0
        %v413 = vpack.c.bf16 %v399, %v395
        %v414 = vpack.c.bf16 %v401, %v397
        %v415 = vpack.c.bf16 %v409, %v405
        %v416 = vpack.c.bf16 %v411, %v407
        %v421 = vunpack.c.l.b16 %v413
        %v422 = vunpack.c.l.b16 %v414
        %v423 = vunpack.c.h.b16 %v413
        %v424 = vunpack.c.h.b16 %v414
        %v425 = vunpack.c.l.b16 %v415
        %v426 = vunpack.c.l.b16 %v416
        %v427 = vunpack.c.h.b16 %v415
        %v428 = vunpack.c.h.b16 %v416
        %v429 = vpack.c.b16 %v422, %v421
        %v430 = vpack.c.b16 %v424, %v423
        %v431 = vpack.c.b16 %v426, %v425
        %v432 = vpack.c.b16 %v428, %v427
        %437 = vst [vmem:[#allocation2] sm:$0xff] %v429
        %438 = vst [vmem:[#allocation2 + $0x8] sm:$0xff] %v430
        %439 = vst [vmem:[#allocation2 + $0x10] sm:$0xff] %v431
        %440 = vst [vmem:[#allocation2 + $0x18] sm:$0xff] %v432
        %v441 = vld [vmem:[%s3] sm:$0xff]
        %v442 = vld [vmem:[%s3 + $0x8] sm:$0xff]
        %v443 = vld [vmem:[%s3 + $0x10] sm:$0xff]
        %v444 = vld [vmem:[%s3 + $0x18] sm:$0xff]
        %v445 = vld [vmem:[#allocation2] sm:$0xff]
        %v446 = vld [vmem:[#allocation2 + $0x8] sm:$0xff]
        %v447 = vld [vmem:[#allocation2 + $0x10] sm:$0xff]
        %v448 = vld [vmem:[#allocation2 + $0x18] sm:$0xff]
        %v449 = vpack.c.bf16 %v442, %v441
        %v450 = vpack.c.bf16 %v444, %v443
        %451 = vxpose.xlu0.c.b16.start [1/8] %v449, 128
        %452 = vxpose.xlu0.c.b16.cont [2/8] %v450, 128
        %453 = vxpose.xlu0.c.b16.cont [3/8] 0, 128
        %454 = vxpose.xlu0.c.b16.cont [4/8] 0, 128
        %455 = vxpose.xlu0.c.b16.cont [5/8] 0, 128
        %456 = vxpose.xlu0.c.b16.cont [6/8] 0, 128
        %457 = vxpose.xlu0.c.b16.cont [7/8] 0, 128
        %458 = vxpose.xlu0.c.b16.end [8/8] 0, 128
        %v459 = vpop.trf.xlu0
        %v460 = vpop.trf.xlu0
        %v461 = vpop.trf.xlu0
        %v462 = vpop.trf.xlu0
        %v463 = vpop.trf.xlu0
        %v464 = vpop.trf.xlu0
        %v465 = vpop.trf.xlu0
        %v466 = vpop.trf.xlu0
        %v471 = vunpack.c.l.b16 %v445
        %v472 = vunpack.c.h.b16 %v445
        %v473 = vunpack.c.l.b16 %v446
        %v474 = vunpack.c.h.b16 %v446
        %v475 = vunpack.c.l.b16 %v447
        %v476 = vunpack.c.h.b16 %v447
        %v477 = vunpack.c.l.b16 %v448
        %v478 = vunpack.c.h.b16 %v448
        %v479 = vpack.c.b16 %v473, %v471
        %v480 = vpack.c.b16 %v474, %v472
        %v481 = vpack.c.b16 %v477, %v475
        %v482 = vpack.c.b16 %v478, %v476
        %v488 = vsel %vm353, %v459, 0
        %490 = vmatprep.subr.bf16.mxu0 0
        %491 = vmatpush1.bf16.msra.mxu0 0
        %492 = vmatprep.subr.bf16.mxu0 0
        %493 = vmatpush1.bf16.msra.mxu0 0
        %494 = vmatprep.subr.bf16.mxu0 0
        %495 = vmatpush1.bf16.msra.mxu0 0
        %496 = vmatprep.subr.bf16.mxu0 0
        %497 = vmatpush1.bf16.msra.mxu0 0
        %498 = vmatprep.subr.bf16.mxu0 0
        %499 = vmatpush1.bf16.msra.mxu0 0
        %500 = vmatprep.subr.bf16.mxu0 0
        %501 = vmatpush1.bf16.msra.mxu0 0
        %502 = vmatprep.subr.bf16.mxu0 %v482
        %503 = vmatpush1.bf16.msra.mxu0 %v481
        %504 = vmatprep.subr.bf16.mxu0 %v480
        %505 = vmatpush1.bf16.msra.mxu0 %v479
        %506 = vmatprep.subr.bf16.mxu0 0
        %507 = vmatpush2.bf16.msra.mxu0 0
        %508 = vmatprep.subr.bf16.mxu0 0
        %509 = vmatpush2.bf16.msra.mxu0 0
        %510 = vmatprep.subr.bf16.mxu0 0
        %511 = vmatpush2.bf16.msra.mxu0 0
        %512 = vmatprep.subr.bf16.mxu0 0
        %513 = vmatpush2.bf16.msra.mxu0 0
        %514 = vmatprep.subr.bf16.mxu0 0
        %515 = vmatpush2.bf16.msra.mxu0 0
        %516 = vmatprep.subr.bf16.mxu0 0
        %517 = vmatpush2.bf16.msra.mxu0 0
        %518 = vmatprep.subr.bf16.mxu0 0
        %519 = vmatpush2.bf16.msra.mxu0 0
        %520 = vmatprep.subr.bf16.mxu0 0
        %521 = vmatpush2.bf16.msra.mxu0 0
        %522 = vmatprep.mubr.bf16.mxu0 0
        %523 = vmatmul.mubr.bf16.gmra.mxu0 %v488
        %v524 = vpop.f32.mrf.mxu0
        %v525 = vadd.f32 0.0, %v524
        %v526 = vpop.f32.mrf.mxu0
        %v527 = vadd.f32 0.0, %v526
        %v528 = vpop.f32.mrf.mxu0
        %v529 = vadd.f32 0.0, %v528
        %v530 = vpop.f32.mrf.mxu0
        %v531 = vadd.f32 0.0, %v530
        %532 = vdwg.mxu0
        %v533 = vmax.f32 %v525, %v529
        %v534 = vrot.slane %v533, 4
        %v535 = vmax.f32 %v533, %v534
        %v536 = vrot.slane %v535, 2
        %v537 = vmax.f32 %v535, %v536
        %v538 = vrot.slane %v537, 1
        %v539 = vmax.f32 %v537, %v538
        %v540 = vmax.f32 %v527, %v531
        %v541 = vrot.slane %v540, 4
        %v542 = vmax.f32 %v540, %v541
        %v543 = vrot.slane %v542, 2
        %v544 = vmax.f32 %v542, %v543
        %v545 = vrot.slane %v544, 1
        %v546 = vmax.f32 %v544, %v545
        %v547 = vsub.f32 %v525, %v539
        %v548 = vsub.f32 %v527, %v546
        %v549 = vsub.f32 %v529, %v539
        %v550 = vsub.f32 %v531, %v546
        %v551 = vmul.f32 %v547, 1.442695
        %v552 = vpow.pop %v551
        %v553 = vmul.f32 %v548, 1.442695
        %v554 = vpow.pop %v553
        %v555 = vmul.f32 %v549, 1.442695
        %v556 = vpow.pop %v555
        %v557 = vmul.f32 %v550, 1.442695
        %v558 = vpow.pop %v557
        %v559 = vadd.f32 %v552, %v556
        %v560 = vrot.slane %v559, 4
        %v561 = vadd.f32 %v559, %v560
        %v562 = vrot.slane %v561, 2
        %v563 = vadd.f32 %v561, %v562
        %v564 = vrot.slane %v563, 1
        %v565 = vadd.f32 %v563, %v564
        %v566 = vadd.f32 %v554, %v558
        %v567 = vrot.slane %v566, 4
        %v568 = vadd.f32 %v566, %v567
        %v569 = vrot.slane %v568, 2
        %v570 = vadd.f32 %v568, %v569
        %v571 = vrot.slane %v570, 1
        %v572 = vadd.f32 %v570, %v571
        %v573 = vrcp.pop %v565
        %v574 = vrcp.pop %v572
        %v575 = vmul.f32 %v552, %v573
        %v576 = vmul.f32 %v554, %v574
        %v577 = vmul.f32 %v556, %v573
        %v578 = vmul.f32 %v558, %v574
        %v579 = vadd.f32 %v575, %v576
        %580 = vadd.xlane.f32.xlu0 %v579
        %v581 = vpop.xlane.xlu0 %580
        %v582 = vadd.f32 %v577, %v578
        %583 = vadd.xlane.f32.xlu0 %v582
        %v584 = vpop.xlane.xlu0 %583
        %v585 = vadd.f32 %v581, 1e-06
        %v586 = vadd.f32 %v584, 1e-06
        %v587 = vrcp.pop %v585
        %v588 = vrcp.pop %v586
        %v589 = vmul.f32 %v575, %v587
        %v590 = vmul.f32 %v576, %v587
        %v591 = vmul.f32 %v577, %v588
        %v592 = vmul.f32 %v578, %v588
        %v593 = vpack.c.bf16 %v591, %v589
        %v594 = vpack.c.bf16 %v592, %v590
        %595 = vmatprep.subr.bf16.mxu0 0
        %596 = vmatpush1.bf16.xpose.msra.mxu0 0
        %597 = vmatprep.subr.bf16.mxu0 0
        %598 = vmatpush1.bf16.xpose.msra.mxu0 0
        %599 = vmatprep.subr.bf16.mxu0 0
        %600 = vmatpush1.bf16.xpose.msra.mxu0 0
        %601 = vmatprep.subr.bf16.mxu0 0
        %602 = vmatpush1.bf16.xpose.msra.mxu0 0
        %603 = vmatprep.subr.bf16.mxu0 0
        %604 = vmatpush1.bf16.xpose.msra.mxu0 0
        %605 = vmatprep.subr.bf16.mxu0 0
        %606 = vmatpush1.bf16.xpose.msra.mxu0 0
        %607 = vmatprep.subr.bf16.mxu0 0
        %608 = vmatpush1.bf16.xpose.msra.mxu0 0
        %609 = vmatprep.subr.bf16.mxu0 %v594
        %610 = vmatpush1.bf16.xpose.msra.mxu0 %v593
        %611 = vmatprep.subr.bf16.mxu0 0
        %612 = vmatpush2.bf16.xpose.msra.mxu0 0
        %613 = vmatprep.subr.bf16.mxu0 0
        %614 = vmatpush2.bf16.xpose.msra.mxu0 0
        %615 = vmatprep.subr.bf16.mxu0 0
        %616 = vmatpush2.bf16.xpose.msra.mxu0 0
        %617 = vmatprep.subr.bf16.mxu0 0
        %618 = vmatpush2.bf16.xpose.msra.mxu0 0
        %619 = vmatprep.subr.bf16.mxu0 0
        %620 = vmatpush2.bf16.xpose.msra.mxu0 0
        %621 = vmatprep.subr.bf16.mxu0 0
        %622 = vmatpush2.bf16.xpose.msra.mxu0 0
        %623 = vmatprep.subr.bf16.mxu0 0
        %624 = vmatpush2.bf16.xpose.msra.mxu0 0
        %625 = vmatprep.subr.bf16.mxu0 0
        %626 = vmatpush2.bf16.xpose.msra.mxu0 0
        %627 = vmatprep.mubr.bf16.mxu0 %v480
        %628 = vmatmul.mubr.bf16.gmra.mxu0 %v479
        %v629 = vpop.f32.mrf.mxu0
        %v630 = vadd.f32 0.0, %v629
        %v631 = vpop.f32.mrf.mxu0
        %v632 = vpop.f32.mrf.mxu0
        %v633 = vadd.f32 0.0, %v632
        %v634 = vpop.f32.mrf.mxu0
        %635 = vmatprep.mubr.bf16.mxu0 %v482
        %636 = vmatmul.mubr.bf16.gmra.mxu0 %v481
        %v637 = vpop.f32.mrf.mxu0
        %v638 = vadd.f32 0.0, %v637
        %v639 = vpop.f32.mrf.mxu0
        %v640 = vpop.f32.mrf.mxu0
        %v641 = vadd.f32 0.0, %v640
        %v642 = vpop.f32.mrf.mxu0
        %643 = vdwg.mxu0
        %v644 = vmul.f32 %v630, %v630
        %v645 = vmul.f32 %v633, %v633
        %v646 = vmul.f32 %v638, %v638
        %v647 = vmul.f32 %v641, %v641
        %vm648 = vcmask 130048
        %v649 = vsel %vm648, %v644, 0.0
        %v650 = vsel %vm648, %v645, 0.0
        %v651 = vadd.f32 %v649, %v650
        %v652 = vsel %vm648, %v646, 0.0
        %v653 = vadd.f32 %v651, %v652
        %v654 = vsel %vm648, %v647, 0.0
        %v655 = vadd.f32 %v653, %v654
        %v656 = vrot.slane %v655, 4
        %v657 = vadd.f32 %v655, %v656
        %v658 = vrot.slane %v657, 2
        %v659 = vadd.f32 %v657, %v658
        %v660 = vrot.slane %v659, 1
        %v661 = vadd.f32 %v659, %v660
        %v662 = vadd.f32 %v661, 1e-12
        %v663 = vrsqrt.pop %v662
        %v664 = vmul.f32 %v630, %v663
        %v665 = vmul.f32 %v633, %v663
        %v666 = vmul.f32 %v638, %v663
        %v667 = vmul.f32 %v641, %v663
        %v668 = vpack.c.bf16 %v665, %v664
        %v669 = vpack.c.bf16 %v667, %v666
        %670 = vxpose.xlu0.c.b16.start [1/8] %v668, 128
        %671 = vxpose.xlu0.c.b16.cont [2/8] %v669, 128
        %672 = vxpose.xlu0.c.b16.cont [3/8] 0, 128
        %673 = vxpose.xlu0.c.b16.cont [4/8] 0, 128
        %674 = vxpose.xlu0.c.b16.cont [5/8] 0, 128
        %675 = vxpose.xlu0.c.b16.cont [6/8] 0, 128
        %676 = vxpose.xlu0.c.b16.cont [7/8] 0, 128
        %677 = vxpose.xlu0.c.b16.end [8/8] 0, 128
        %v678 = vpop.trf.xlu0
        %v679 = vpop.trf.xlu0
        %v680 = vpop.trf.xlu0
        %v681 = vpop.trf.xlu0
        %v682 = vpop.trf.xlu0
        %v683 = vpop.trf.xlu0
        %v684 = vpop.trf.xlu0
        %v685 = vpop.trf.xlu0
        %v687 = vsel %vm353, %v678, 0
        %689 = vmatprep.subr.bf16.mxu0 0
        %690 = vmatpush1.bf16.msra.mxu0 0
        %691 = vmatprep.subr.bf16.mxu0 0
        %692 = vmatpush1.bf16.msra.mxu0 0
        %693 = vmatprep.subr.bf16.mxu0 0
        %694 = vmatpush1.bf16.msra.mxu0 0
        %695 = vmatprep.subr.bf16.mxu0 0
        %696 = vmatpush1.bf16.msra.mxu0 0
        %697 = vmatprep.subr.bf16.mxu0 0
        %698 = vmatpush1.bf16.msra.mxu0 0
        %699 = vmatprep.subr.bf16.mxu0 0
        %700 = vmatpush1.bf16.msra.mxu0 0
        %701 = vmatprep.subr.bf16.mxu0 %v482
        %702 = vmatpush1.bf16.msra.mxu0 %v481
        %703 = vmatprep.subr.bf16.mxu0 %v480
        %704 = vmatpush1.bf16.msra.mxu0 %v479
        %705 = vmatprep.subr.bf16.mxu0 0
        %706 = vmatpush2.bf16.msra.mxu0 0
        %707 = vmatprep.subr.bf16.mxu0 0
        %708 = vmatpush2.bf16.msra.mxu0 0
        %709 = vmatprep.subr.bf16.mxu0 0
        %710 = vmatpush2.bf16.msra.mxu0 0
        %711 = vmatprep.subr.bf16.mxu0 0
        %712 = vmatpush2.bf16.msra.mxu0 0
        %713 = vmatprep.subr.bf16.mxu0 0
        %714 = vmatpush2.bf16.msra.mxu0 0
        %715 = vmatprep.subr.bf16.mxu0 0
        %716 = vmatpush2.bf16.msra.mxu0 0
        %717 = vmatprep.subr.bf16.mxu0 0
        %718 = vmatpush2.bf16.msra.mxu0 0
        %719 = vmatprep.subr.bf16.mxu0 0
        %720 = vmatpush2.bf16.msra.mxu0 0
        %721 = vmatprep.mubr.bf16.mxu0 0
        %722 = vmatmul.mubr.bf16.gmra.mxu0 %v687
        %v723 = vpop.f32.mrf.mxu0
        %v724 = vadd.f32 0.0, %v723
        %v725 = vpop.f32.mrf.mxu0
        %v726 = vadd.f32 0.0, %v725
        %v727 = vpop.f32.mrf.mxu0
        %v728 = vadd.f32 0.0, %v727
        %v729 = vpop.f32.mrf.mxu0
        %v730 = vadd.f32 0.0, %v729
        %731 = vdwg.mxu0
        %v732 = vmax.f32 %v724, %v728
        %v733 = vrot.slane %v732, 4
        %v734 = vmax.f32 %v732, %v733
        %v735 = vrot.slane %v734, 2
        %v736 = vmax.f32 %v734, %v735
        %v737 = vrot.slane %v736, 1
        %v738 = vmax.f32 %v736, %v737
        %v739 = vmax.f32 %v726, %v730
        %v740 = vrot.slane %v739, 4
        %v741 = vmax.f32 %v739, %v740
        %v742 = vrot.slane %v741, 2
        %v743 = vmax.f32 %v741, %v742
        %v744 = vrot.slane %v743, 1
        %v745 = vmax.f32 %v743, %v744
        %v746 = vsub.f32 %v724, %v738
        %v747 = vsub.f32 %v726, %v745
        %v748 = vsub.f32 %v728, %v738
        %v749 = vsub.f32 %v730, %v745
        %v750 = vmul.f32 %v746, 1.442695
        %v751 = vpow.pop %v750
        %v752 = vmul.f32 %v747, 1.442695
        %v753 = vpow.pop %v752
        %v754 = vmul.f32 %v748, 1.442695
        %v755 = vpow.pop %v754
        %v756 = vmul.f32 %v749, 1.442695
        %v757 = vpow.pop %v756
        %v758 = vadd.f32 %v751, %v755
        %v759 = vrot.slane %v758, 4
        %v760 = vadd.f32 %v758, %v759
        %v761 = vrot.slane %v760, 2
        %v762 = vadd.f32 %v760, %v761
        %v763 = vrot.slane %v762, 1
        %v764 = vadd.f32 %v762, %v763
        %v765 = vadd.f32 %v753, %v757
        %v766 = vrot.slane %v765, 4
        %v767 = vadd.f32 %v765, %v766
        %v768 = vrot.slane %v767, 2
        %v769 = vadd.f32 %v767, %v768
        %v770 = vrot.slane %v769, 1
        %v771 = vadd.f32 %v769, %v770
        %v772 = vrcp.pop %v764
        %v773 = vrcp.pop %v771
        %v774 = vmul.f32 %v751, %v772
        %v775 = vmul.f32 %v753, %v773
        %v776 = vmul.f32 %v755, %v772
        %v777 = vmul.f32 %v757, %v773
        %v778 = vadd.f32 %v774, %v775
        %779 = vadd.xlane.f32.xlu0 %v778
        %v780 = vpop.xlane.xlu0 %779
        %v781 = vadd.f32 %v776, %v777
        %782 = vadd.xlane.f32.xlu0 %v781
        %v783 = vpop.xlane.xlu0 %782
        %v784 = vadd.f32 %v780, 1e-06
        %v785 = vadd.f32 %v783, 1e-06
        %v786 = vrcp.pop %v784
        %v787 = vrcp.pop %v785
        %v788 = vmul.f32 %v774, %v786
        %v789 = vmul.f32 %v775, %v786
        %v790 = vmul.f32 %v776, %v787
        %v791 = vmul.f32 %v777, %v787
        %v792 = vpack.c.bf16 %v790, %v788
        %v793 = vpack.c.bf16 %v791, %v789
        %794 = vmatprep.subr.bf16.mxu0 0
        %795 = vmatpush1.bf16.xpose.msra.mxu0 0
        %796 = vmatprep.subr.bf16.mxu0 0
        %797 = vmatpush1.bf16.xpose.msra.mxu0 0
        %798 = vmatprep.subr.bf16.mxu0 0
        %799 = vmatpush1.bf16.xpose.msra.mxu0 0
        %800 = vmatprep.subr.bf16.mxu0 0
        %801 = vmatpush1.bf16.xpose.msra.mxu0 0
        %802 = vmatprep.subr.bf16.mxu0 0
        %803 = vmatpush1.bf16.xpose.msra.mxu0 0
        %804 = vmatprep.subr.bf16.mxu0 0
        %805 = vmatpush1.bf16.xpose.msra.mxu0 0
        %806 = vmatprep.subr.bf16.mxu0 0
        %807 = vmatpush1.bf16.xpose.msra.mxu0 0
        %808 = vmatprep.subr.bf16.mxu0 %v793
        %809 = vmatpush1.bf16.xpose.msra.mxu0 %v792
        %810 = vmatprep.subr.bf16.mxu0 0
        %811 = vmatpush2.bf16.xpose.msra.mxu0 0
        %812 = vmatprep.subr.bf16.mxu0 0
        %813 = vmatpush2.bf16.xpose.msra.mxu0 0
        %814 = vmatprep.subr.bf16.mxu0 0
        %815 = vmatpush2.bf16.xpose.msra.mxu0 0
        %816 = vmatprep.subr.bf16.mxu0 0
        %817 = vmatpush2.bf16.xpose.msra.mxu0 0
        %818 = vmatprep.subr.bf16.mxu0 0
        %819 = vmatpush2.bf16.xpose.msra.mxu0 0
        %820 = vmatprep.subr.bf16.mxu0 0
        %821 = vmatpush2.bf16.xpose.msra.mxu0 0
        %822 = vmatprep.subr.bf16.mxu0 0
        %823 = vmatpush2.bf16.xpose.msra.mxu0 0
        %824 = vmatprep.subr.bf16.mxu0 0
        %825 = vmatpush2.bf16.xpose.msra.mxu0 0
        %826 = vmatprep.mubr.bf16.mxu0 %v480
        %827 = vmatmul.mubr.bf16.gmra.mxu0 %v479
        %v828 = vpop.f32.mrf.mxu0
        %v829 = vadd.f32 0.0, %v828
        %v830 = vpop.f32.mrf.mxu0
        %v831 = vpop.f32.mrf.mxu0
        %v832 = vadd.f32 0.0, %v831
        %v833 = vpop.f32.mrf.mxu0
        %834 = vmatprep.mubr.bf16.mxu0 %v482
        %835 = vmatmul.mubr.bf16.gmra.mxu0 %v481
        %v836 = vpop.f32.mrf.mxu0
        %v837 = vadd.f32 0.0, %v836
        %v838 = vpop.f32.mrf.mxu0
        %v839 = vpop.f32.mrf.mxu0
        %v840 = vadd.f32 0.0, %v839
        %v841 = vpop.f32.mrf.mxu0
        %842 = vdwg.mxu0
        %v843 = vmul.f32 %v829, %v829
        %v844 = vmul.f32 %v832, %v832
        %v845 = vmul.f32 %v837, %v837
        %v846 = vmul.f32 %v840, %v840
        %v847 = vsel %vm648, %v843, 0.0
        %v848 = vsel %vm648, %v844, 0.0
        %v849 = vadd.f32 %v847, %v848
        %v850 = vsel %vm648, %v845, 0.0
        %v851 = vadd.f32 %v849, %v850
        %v852 = vsel %vm648, %v846, 0.0
        %v853 = vadd.f32 %v851, %v852
        %v854 = vrot.slane %v853, 4
        %v855 = vadd.f32 %v853, %v854
        %v856 = vrot.slane %v855, 2
        %v857 = vadd.f32 %v855, %v856
        %v858 = vrot.slane %v857, 1
        %v859 = vadd.f32 %v857, %v858
        %v860 = vadd.f32 %v859, 1e-12
        %v861 = vrsqrt.pop %v860
        %v862 = vmul.f32 %v829, %v861
        %v863 = vmul.f32 %v832, %v861
        %v864 = vmul.f32 %v837, %v861
        %v865 = vmul.f32 %v840, %v861
        %v866 = vpack.c.bf16 %v863, %v862
        %v867 = vpack.c.bf16 %v865, %v864
        %868 = vxpose.xlu0.c.b16.start [1/8] %v866, 128
        %869 = vxpose.xlu0.c.b16.cont [2/8] %v867, 128
        %870 = vxpose.xlu0.c.b16.cont [3/8] 0, 128
        %871 = vxpose.xlu0.c.b16.cont [4/8] 0, 128
        %872 = vxpose.xlu0.c.b16.cont [5/8] 0, 128
        %873 = vxpose.xlu0.c.b16.cont [6/8] 0, 128
        %874 = vxpose.xlu0.c.b16.cont [7/8] 0, 128
        %875 = vxpose.xlu0.c.b16.end [8/8] 0, 128
        %v876 = vpop.trf.xlu0
        %v877 = vpop.trf.xlu0
        %v878 = vpop.trf.xlu0
        %v879 = vpop.trf.xlu0
        %v880 = vpop.trf.xlu0
        %v881 = vpop.trf.xlu0
        %v882 = vpop.trf.xlu0
        %v883 = vpop.trf.xlu0
        %v885 = vsel %vm353, %v876, 0
        %887 = vmatprep.subr.bf16.mxu0 0
        %888 = vmatpush1.bf16.msra.mxu0 0
        %889 = vmatprep.subr.bf16.mxu0 0
        %890 = vmatpush1.bf16.msra.mxu0 0
        %891 = vmatprep.subr.bf16.mxu0 0
        %892 = vmatpush1.bf16.msra.mxu0 0
        %893 = vmatprep.subr.bf16.mxu0 0
        %894 = vmatpush1.bf16.msra.mxu0 0
        %895 = vmatprep.subr.bf16.mxu0 0
        %896 = vmatpush1.bf16.msra.mxu0 0
        %897 = vmatprep.subr.bf16.mxu0 0
        %898 = vmatpush1.bf16.msra.mxu0 0
        %899 = vmatprep.subr.bf16.mxu0 %v482
        %900 = vmatpush1.bf16.msra.mxu0 %v481
        %901 = vmatprep.subr.bf16.mxu0 %v480
        %902 = vmatpush1.bf16.msra.mxu0 %v479
        %903 = vmatprep.subr.bf16.mxu0 0
        %904 = vmatpush2.bf16.msra.mxu0 0
        %905 = vmatprep.subr.bf16.mxu0 0
        %906 = vmatpush2.bf16.msra.mxu0 0
        %907 = vmatprep.subr.bf16.mxu0 0
        %908 = vmatpush2.bf16.msra.mxu0 0
        %909 = vmatprep.subr.bf16.mxu0 0
        %910 = vmatpush2.bf16.msra.mxu0 0
        %911 = vmatprep.subr.bf16.mxu0 0
        %912 = vmatpush2.bf16.msra.mxu0 0
        %913 = vmatprep.subr.bf16.mxu0 0
        %914 = vmatpush2.bf16.msra.mxu0 0
        %915 = vmatprep.subr.bf16.mxu0 0
        %916 = vmatpush2.bf16.msra.mxu0 0
        %917 = vmatprep.subr.bf16.mxu0 0
        %918 = vmatpush2.bf16.msra.mxu0 0
        %919 = vmatprep.mubr.bf16.mxu0 0
        %920 = vmatmul.mubr.bf16.gmra.mxu0 %v885
        %v921 = vpop.f32.mrf.mxu0
        %v922 = vadd.f32 0.0, %v921
        %v923 = vpop.f32.mrf.mxu0
        %v924 = vadd.f32 0.0, %v923
        %v925 = vpop.f32.mrf.mxu0
        %v926 = vadd.f32 0.0, %v925
        %v927 = vpop.f32.mrf.mxu0
        %v928 = vadd.f32 0.0, %v927
        %929 = vdwg.mxu0
        %v930 = vmax.f32 %v922, %v926
        %v931 = vrot.slane %v930, 4
        %v932 = vmax.f32 %v930, %v931
        %v933 = vrot.slane %v932, 2
        %v934 = vmax.f32 %v932, %v933
        %v935 = vrot.slane %v934, 1
        %v936 = vmax.f32 %v934, %v935
        %v937 = vmax.f32 %v924, %v928
        %v938 = vrot.slane %v937, 4
        %v939 = vmax.f32 %v937, %v938
        %v940 = vrot.slane %v939, 2
        %v941 = vmax.f32 %v939, %v940
        %v942 = vrot.slane %v941, 1
        %v943 = vmax.f32 %v941, %v942
        %v944 = vsub.f32 %v922, %v936
        %v945 = vsub.f32 %v924, %v943
        %v946 = vsub.f32 %v926, %v936
        %v947 = vsub.f32 %v928, %v943
        %v948 = vmul.f32 %v944, 1.442695
        %v949 = vpow.pop %v948
        %v950 = vmul.f32 %v945, 1.442695
        %v951 = vpow.pop %v950
        %v952 = vmul.f32 %v946, 1.442695
        %v953 = vpow.pop %v952
        %v954 = vmul.f32 %v947, 1.442695
        %v955 = vpow.pop %v954
        %v956 = vadd.f32 %v949, %v953
        %v957 = vrot.slane %v956, 4
        %v958 = vadd.f32 %v956, %v957
        %v959 = vrot.slane %v958, 2
        %v960 = vadd.f32 %v958, %v959
        %v961 = vrot.slane %v960, 1
        %v962 = vadd.f32 %v960, %v961
        %v963 = vadd.f32 %v951, %v955
        %v964 = vrot.slane %v963, 4
        %v965 = vadd.f32 %v963, %v964
        %v966 = vrot.slane %v965, 2
        %v967 = vadd.f32 %v965, %v966
        %v968 = vrot.slane %v967, 1
        %v969 = vadd.f32 %v967, %v968
        %v970 = vrcp.pop %v962
        %v971 = vrcp.pop %v969
        %v972 = vmul.f32 %v949, %v970
        %v973 = vmul.f32 %v951, %v971
        %v974 = vmul.f32 %v953, %v970
        %v975 = vmul.f32 %v955, %v971
        %v976 = vadd.f32 %v972, %v973
        %977 = vadd.xlane.f32.xlu0 %v976
        %v978 = vpop.xlane.xlu0 %977
        %v979 = vadd.f32 %v974, %v975
        %980 = vadd.xlane.f32.xlu0 %v979
        %v981 = vpop.xlane.xlu0 %980
        %v982 = vadd.f32 %v978, 1e-06
        %v983 = vadd.f32 %v981, 1e-06
        %v984 = vrcp.pop %v982
        %v985 = vrcp.pop %v983
        %v986 = vmul.f32 %v972, %v984
        %v987 = vmul.f32 %v973, %v984
        %v988 = vmul.f32 %v974, %v985
        %v989 = vmul.f32 %v975, %v985
        %v990 = vpack.c.bf16 %v988, %v986
        %v991 = vpack.c.bf16 %v989, %v987
        %992 = vmatprep.subr.bf16.mxu0 0
        %993 = vmatpush1.bf16.xpose.msra.mxu0 0
        %994 = vmatprep.subr.bf16.mxu0 0
        %995 = vmatpush1.bf16.xpose.msra.mxu0 0
        %996 = vmatprep.subr.bf16.mxu0 0
        %997 = vmatpush1.bf16.xpose.msra.mxu0 0
        %998 = vmatprep.subr.bf16.mxu0 0
        %999 = vmatpush1.bf16.xpose.msra.mxu0 0
        %1000 = vmatprep.subr.bf16.mxu0 0
        %1001 = vmatpush1.bf16.xpose.msra.mxu0 0
        %1002 = vmatprep.subr.bf16.mxu0 0
        %1003 = vmatpush1.bf16.xpose.msra.mxu0 0
        %1004 = vmatprep.subr.bf16.mxu0 0
        %1005 = vmatpush1.bf16.xpose.msra.mxu0 0
        %1006 = vmatprep.subr.bf16.mxu0 %v991
        %1007 = vmatpush1.bf16.xpose.msra.mxu0 %v990
        %1008 = vmatprep.subr.bf16.mxu0 0
        %1009 = vmatpush2.bf16.xpose.msra.mxu0 0
        %1010 = vmatprep.subr.bf16.mxu0 0
        %1011 = vmatpush2.bf16.xpose.msra.mxu0 0
        %1012 = vmatprep.subr.bf16.mxu0 0
        %1013 = vmatpush2.bf16.xpose.msra.mxu0 0
        %1014 = vmatprep.subr.bf16.mxu0 0
        %1015 = vmatpush2.bf16.xpose.msra.mxu0 0
        %1016 = vmatprep.subr.bf16.mxu0 0
        %1017 = vmatpush2.bf16.xpose.msra.mxu0 0
        %1018 = vmatprep.subr.bf16.mxu0 0
        %1019 = vmatpush2.bf16.xpose.msra.mxu0 0
        %1020 = vmatprep.subr.bf16.mxu0 0
        %1021 = vmatpush2.bf16.xpose.msra.mxu0 0
        %1022 = vmatprep.subr.bf16.mxu0 0
        %1023 = vmatpush2.bf16.xpose.msra.mxu0 0
        %1024 = vmatprep.mubr.bf16.mxu0 %v480
        %1025 = vmatmul.mubr.bf16.gmra.mxu0 %v479
        %v1026 = vpop.f32.mrf.mxu0
        %v1027 = vadd.f32 0.0, %v1026
        %v1028 = vpop.f32.mrf.mxu0
        %v1029 = vpop.f32.mrf.mxu0
        %v1030 = vadd.f32 0.0, %v1029
        %v1031 = vpop.f32.mrf.mxu0
        %1032 = vmatprep.mubr.bf16.mxu0 %v482
        %1033 = vmatmul.mubr.bf16.gmra.mxu0 %v481
        %v1034 = vpop.f32.mrf.mxu0
        %v1035 = vadd.f32 0.0, %v1034
        %v1036 = vpop.f32.mrf.mxu0
        %v1037 = vpop.f32.mrf.mxu0
        %v1038 = vadd.f32 0.0, %v1037
        %v1039 = vpop.f32.mrf.mxu0
        %1040 = vdwg.mxu0
        %v1041 = vmul.f32 %v1027, %v1027
        %v1042 = vmul.f32 %v1030, %v1030
        %v1043 = vmul.f32 %v1035, %v1035
        %v1044 = vmul.f32 %v1038, %v1038
        %v1045 = vsel %vm648, %v1041, 0.0
        %v1046 = vsel %vm648, %v1042, 0.0
        %v1047 = vadd.f32 %v1045, %v1046
        %v1048 = vsel %vm648, %v1043, 0.0
        %v1049 = vadd.f32 %v1047, %v1048
        %v1050 = vsel %vm648, %v1044, 0.0
        %v1051 = vadd.f32 %v1049, %v1050
        %v1052 = vrot.slane %v1051, 4
        %v1053 = vadd.f32 %v1051, %v1052
        %v1054 = vrot.slane %v1053, 2
        %v1055 = vadd.f32 %v1053, %v1054
        %v1056 = vrot.slane %v1055, 1
        %v1057 = vadd.f32 %v1055, %v1056
        %v1058 = vadd.f32 %v1057, 1e-12
        %v1059 = vrsqrt.pop %v1058
        %v1060 = vmul.f32 %v1027, %v1059
        %v1061 = vmul.f32 %v1030, %v1059
        %v1062 = vmul.f32 %v1035, %v1059
        %v1063 = vmul.f32 %v1038, %v1059
        %1064 = vst.msk [vmem:[%s309] sm:$0xff] %vm648, %v1060
        %1065 = vst.msk [vmem:[%s309 + $0x8] sm:$0xff] %vm648, %v1061
        %1066 = vst.msk [vmem:[%s309 + $0x10] sm:$0xff] %vm648, %v1062
        %1067 = vst.msk [vmem:[%s309 + $0x18] sm:$0xff] %vm648, %v1063
        %v1068 = vpack.c.bf16 %v1061, %v1060
        %v1069 = vpack.c.bf16 %v1063, %v1062
        %v1070 = vpack.c.bf16 %v974, %v972
        %v1071 = vpack.c.bf16 %v975, %v973
        %v1073 = vsel %vm648, %v1068, 0
        %v1076 = vsel %vm648, %v1069, 0
        %1078 = vmatprep.subr.bf16.mxu0 0
        %1079 = vmatpush1.bf16.msra.mxu0 0
        %1080 = vmatprep.subr.bf16.mxu0 0
        %1081 = vmatpush1.bf16.msra.mxu0 0
        %1082 = vmatprep.subr.bf16.mxu0 0
        %1083 = vmatpush1.bf16.msra.mxu0 0
        %1084 = vmatprep.subr.bf16.mxu0 0
        %1085 = vmatpush1.bf16.msra.mxu0 0
        %1086 = vmatprep.subr.bf16.mxu0 0
        %1087 = vmatpush1.bf16.msra.mxu0 0
        %1088 = vmatprep.subr.bf16.mxu0 0
        %1089 = vmatpush1.bf16.msra.mxu0 0
        %1090 = vmatprep.subr.bf16.mxu0 0
        %1091 = vmatpush1.bf16.msra.mxu0 0
        %1092 = vmatprep.subr.bf16.mxu0 %v1071
        %1093 = vmatpush1.bf16.msra.mxu0 %v1070
        %1094 = vmatprep.subr.bf16.mxu0 0
        %1095 = vmatpush2.bf16.msra.mxu0 0
        %1096 = vmatprep.subr.bf16.mxu0 0
        %1097 = vmatpush2.bf16.msra.mxu0 0
        %1098 = vmatprep.subr.bf16.mxu0 0
        %1099 = vmatpush2.bf16.msra.mxu0 0
        %1100 = vmatprep.subr.bf16.mxu0 0
        %1101 = vmatpush2.bf16.msra.mxu0 0
        %1102 = vmatprep.subr.bf16.mxu0 0
        %1103 = vmatpush2.bf16.msra.mxu0 0
        %1104 = vmatprep.subr.bf16.mxu0 0
        %1105 = vmatpush2.bf16.msra.mxu0 0
        %1106 = vmatprep.subr.bf16.mxu0 0
        %1107 = vmatpush2.bf16.msra.mxu0 0
        %1108 = vmatprep.subr.bf16.mxu0 0
        %1109 = vmatpush2.bf16.msra.mxu0 0
        %1110 = vmatprep.mubr.bf16.mxu0 0
        %1111 = vmatmul.mubr.bf16.gmra.mxu0 %v1073
        %v1112 = vpop.f32.mrf.mxu0
        %v1113 = vadd.f32 0.0, %v1112
        %v1114 = vpop.f32.mrf.mxu0
        %v1115 = vadd.f32 0.0, %v1114
        %v1116 = vpop.f32.mrf.mxu0
        %v1117 = vadd.f32 0.0, %v1116
        %v1118 = vpop.f32.mrf.mxu0
        %v1119 = vadd.f32 0.0, %v1118
        %1120 = vmatprep.mubr.bf16.mxu0 0
        %1121 = vmatmul.mubr.bf16.gmra.mxu0 %v1076
        %v1122 = vpop.f32.mrf.mxu0
        %v1123 = vadd.f32 0.0, %v1122
        %v1124 = vpop.f32.mrf.mxu0
        %v1125 = vadd.f32 0.0, %v1124
        %v1126 = vpop.f32.mrf.mxu0
        %v1127 = vadd.f32 0.0, %v1126
        %v1128 = vpop.f32.mrf.mxu0
        %v1129 = vadd.f32 0.0, %v1128
        %1130 = vdwg.mxu0
        %v1131 = vmax.f32 %v1113, 0.0
        %v1132 = vmax.f32 %v1115, 0.0
        %v1133 = vmax.f32 %v1117, 0.0
        %v1134 = vmax.f32 %v1119, 0.0
        %v1135 = vmax.f32 %v1123, 0.0
        %v1136 = vmax.f32 %v1125, 0.0
        %v1137 = vmax.f32 %v1127, 0.0
        %v1138 = vmax.f32 %v1129, 0.0
        %v1139 = vpack.c.bf16 %v1133, %v1131
        %v1140 = vpack.c.bf16 %v1134, %v1132
        %v1141 = vpack.c.bf16 %v1137, %v1135
        %v1142 = vpack.c.bf16 %v1138, %v1136
        %v1143 = vld [vmem:[%s4] sm:$0xff]
        %v1144 = vld [vmem:[%s4 + $0x8] sm:$0xff]
        %v1145 = vld [vmem:[%s4 + $0x10] sm:$0xff]
        %v1146 = vld [vmem:[%s4 + $0x18] sm:$0xff]
        %v1147 = vpack.c.bf16 %v1144, %v1143
        %v1148 = vpack.c.bf16 %v1146, %v1145
        %v1149 = vld [vmem:[%s5] sm:$0xff]
        %v1150 = vld [vmem:[%s5 + $0x8] sm:$0xff]
        %v1151 = vld [vmem:[%s5 + $0x10] sm:$0xff]
        %v1152 = vld [vmem:[%s5 + $0x18] sm:$0xff]
        %1154 = vset.pattern.permute.xlu0 0
        %1155 = vperm.xlu0 %1154, %v1149
        %v1156 = vpop.permute.xlu0 %1155
        %1159 = vset.pattern.permute.xlu0 0
        %1160 = vperm.xlu0 %1159, %v1150
        %v1161 = vpop.permute.xlu0 %1160
        %1164 = vset.pattern.permute.xlu0 0
        %1165 = vperm.xlu0 %1164, %v1151
        %v1166 = vpop.permute.xlu0 %1165
        %1169 = vset.pattern.permute.xlu0 0
        %1170 = vperm.xlu0 %1169, %v1152
        %v1171 = vpop.permute.xlu0 %1170
        %v1174 = vsel %vm353, %v1147, 0
        %v1177 = vsel %vm353, %v1148, 0
        %1179 = vmatprep.subr.bf16.mxu0 0
        %1180 = vmatpush1.bf16.msra.mxu0 0
        %1181 = vmatprep.subr.bf16.mxu0 0
        %1182 = vmatpush1.bf16.msra.mxu0 0
        %1183 = vmatprep.subr.bf16.mxu0 0
        %1184 = vmatpush1.bf16.msra.mxu0 0
        %1185 = vmatprep.subr.bf16.mxu0 0
        %1186 = vmatpush1.bf16.msra.mxu0 0
        %1187 = vmatprep.subr.bf16.mxu0 0
        %1188 = vmatpush1.bf16.msra.mxu0 0
        %1189 = vmatprep.subr.bf16.mxu0 0
        %1190 = vmatpush1.bf16.msra.mxu0 0
        %1191 = vmatprep.subr.bf16.mxu0 %v1142
        %1192 = vmatpush1.bf16.msra.mxu0 %v1141
        %1193 = vmatprep.subr.bf16.mxu0 %v1140
        %1194 = vmatpush1.bf16.msra.mxu0 %v1139
        %1195 = vmatprep.subr.bf16.mxu0 0
        %1196 = vmatpush2.bf16.msra.mxu0 0
        %1197 = vmatprep.subr.bf16.mxu0 0
        %1198 = vmatpush2.bf16.msra.mxu0 0
        %1199 = vmatprep.subr.bf16.mxu0 0
        %1200 = vmatpush2.bf16.msra.mxu0 0
        %1201 = vmatprep.subr.bf16.mxu0 0
        %1202 = vmatpush2.bf16.msra.mxu0 0
        %1203 = vmatprep.subr.bf16.mxu0 0
        %1204 = vmatpush2.bf16.msra.mxu0 0
        %1205 = vmatprep.subr.bf16.mxu0 0
        %1206 = vmatpush2.bf16.msra.mxu0 0
        %1207 = vmatprep.subr.bf16.mxu0 0
        %1208 = vmatpush2.bf16.msra.mxu0 0
        %1209 = vmatprep.subr.bf16.mxu0 0
        %1210 = vmatpush2.bf16.msra.mxu0 0
        %1211 = vmatprep.mubr.bf16.mxu0 0
        %1212 = vmatmul.mubr.bf16.gmra.mxu0 %v1174
        %v1213 = vpop.f32.mrf.mxu0
        %v1214 = vadd.f32 %v1156, %v1213
        %v1215 = vpop.f32.mrf.mxu0
        %v1216 = vadd.f32 %v1156, %v1215
        %v1217 = vpop.f32.mrf.mxu0
        %v1218 = vadd.f32 %v1161, %v1217
        %v1219 = vpop.f32.mrf.mxu0
        %v1220 = vadd.f32 %v1161, %v1219
        %1221 = vmatprep.mubr.bf16.mxu0 0
        %1222 = vmatmul.mubr.bf16.gmra.mxu0 %v1177
        %v1223 = vpop.f32.mrf.mxu0
        %v1224 = vadd.f32 %v1166, %v1223
        %v1225 = vpop.f32.mrf.mxu0
        %v1226 = vadd.f32 %v1166, %v1225
        %v1227 = vpop.f32.mrf.mxu0
        %v1228 = vadd.f32 %v1171, %v1227
        %v1229 = vpop.f32.mrf.mxu0
        %v1230 = vadd.f32 %v1171, %v1229
        %1231 = vdwg.mxu0
        %v1232 = vld [vmem:[%s269] sm:$0xff]
        %v1233 = vld [vmem:[%s269 + $0x8] sm:$0xff]
        %v1234 = vld [vmem:[%s269 + $0x10] sm:$0xff]
        %v1235 = vld [vmem:[%s269 + $0x18] sm:$0xff]
        %v1236 = vld [vmem:[%s269 + $0x20] sm:$0xff]
        %v1237 = vld [vmem:[%s269 + $0x28] sm:$0xff]
        %v1238 = vld [vmem:[%s269 + $0x30] sm:$0xff]
        %v1239 = vld [vmem:[%s269 + $0x38] sm:$0xff]
        %v1240 = vadd.f32 %v1214, %v1232
        %v1241 = vadd.f32 %v1216, %v1233
        %v1242 = vadd.f32 %v1218, %v1234
        %v1243 = vadd.f32 %v1220, %v1235
        %v1244 = vadd.f32 %v1224, %v1236
        %v1245 = vadd.f32 %v1226, %v1237
        %v1246 = vadd.f32 %v1228, %v1238
        %v1247 = vadd.f32 %v1230, %v1239
        %v1248 = vmax.f32 %v1240, 0.0
        %v1249 = vmax.f32 %v1241, 0.0
        %v1250 = vmax.f32 %v1242, 0.0
        %v1251 = vmax.f32 %v1243, 0.0
        %v1252 = vmax.f32 %v1244, 0.0
        %v1253 = vmax.f32 %v1245, 0.0
        %v1254 = vmax.f32 %v1246, 0.0
        %v1255 = vmax.f32 %v1247, 0.0
        %1256 = vst [vmem:[%s297] sm:$0xff] %v1248
        %1257 = vst [vmem:[%s297 + $0x8] sm:$0xff] %v1249
        %1258 = vst [vmem:[%s297 + $0x10] sm:$0xff] %v1250
        %1259 = vst [vmem:[%s297 + $0x18] sm:$0xff] %v1251
        %1260 = vst [vmem:[%s297 + $0x20] sm:$0xff] %v1252
        %1261 = vst [vmem:[%s297 + $0x28] sm:$0xff] %v1253
        %1262 = vst [vmem:[%s297 + $0x30] sm:$0xff] %v1254
        %1263 = vst [vmem:[%s297 + $0x38] sm:$0xff] %v1255
        %s1264 = sand.u32 %s164, 1
        %s1265 = scalar_lea.sflag [#allocation5], %s1264
        %s1266 = sand.u32 %s164, 1
        %s1267 = smul.addr %s1266, 64
        %s1268 = scalar_lea.vmem [#allocation6], %s1267
        %p1269 = scmp.lt.s32.totalorder %s25, 3
        %s1270 = scalar_select %p1269, %s25, 3
        %s1271 = smul.addr %s1270, 4
        %s1272 = smul.addr %s1271, 8
        %s1273 = scalar_lea.vmem %s7, %s1272
        // Predicated region
        $region49: #{tpu_custom_call.1} parent=43 // pred_check
          %p1274 = pneg %p174
        $region50: #{tpu_custom_call.1} parent=43 // pred_check_branch
          %1276 = sbr.rel (%p1274) target = $region52
        $region51: #{tpu_custom_call.1} parent=43 // pred_region
          %s1278 = ssub.s32 1024, 1024
          %1279 = vsyncadd %s1265, %s1278
          %s1280 = smul.addr %s25, 8
          %s1281 = smul.addr %s1280, 128
          %s1282 = scalar_lea.hbm %s6, %s1281
          %s1283 = sshll.u32 %s1268, 4
          %s1284 = int_to_ptr.vmem [resolvable:$true] %s1283
          %1289 = dma.vmem_to_hbm [thread:$0]  %s1284, 1024, %s1282, %s1265, 256, 256, 16
        $region52: #{tpu_custom_call.1} parent=43 // pred_fallthru
          _
        // Predicated region
        $region53: #{tpu_custom_call.1} parent=43 // pred_check
          %p1290 = pneg %p200
        $region54: #{tpu_custom_call.1} parent=43 // pred_check_branch
          %1292 = sbr.rel (%p1290) target = $region56
        $region55: #{tpu_custom_call.1} parent=43 // pred_region
          _
        $region56: #{tpu_custom_call.1} parent=43 // pred_fallthru
          _
      $region44: #{tpu_custom_call.1} parent=5 // pred_fallthru
        _
      %p1293 = scmp.le.s32.totalorder 2, %s20
      // Predicated region
      $region57: #{tpu_custom_call.1} parent=5 // pred_check
        %p1294 = pneg %p1293
      $region58: #{tpu_custom_call.1} parent=5 // pred_check_branch
        %1296 = sbr.rel (%p1294) target = $region60
      $region59: #{tpu_custom_call.1} parent=5 // pred_region
        %s1297 = ssub.s32 %s20, 2
        // Predicated region
        $region61: #{tpu_custom_call.1} parent=59 // pred_check
          %p1298 = pneg %p180
        $region62: #{tpu_custom_call.1} parent=59 // pred_check_branch
          %1300 = sbr.rel (%p1298) target = $region64
        $region63: #{tpu_custom_call.1} parent=59 // pred_region
          %s1301 = sand.u32 %s165, 1
          %s1302 = scalar_lea.sflag [#allocation5], %s1301
          %s1303 = sand.u32 %s165, 1
          %s1304 = smul.addr %s1303, 64
          %s1305 = scalar_lea.vmem [#allocation6], %s1304
          %1306 = dma.done %s1302, 1024
        $region64: #{tpu_custom_call.1} parent=59 // pred_fallthru
          _
        // Predicated region
        $region65: #{tpu_custom_call.1} parent=59 // pred_check
          %p1307 = pneg %p206
        $region66: #{tpu_custom_call.1} parent=59 // pred_check_branch
          %1309 = sbr.rel (%p1307) target = $region68
        $region67: #{tpu_custom_call.1} parent=59 // pred_region
          %p1310 = scmp.lt.s32.totalorder %s26, 3
          %s1311 = scalar_select %p1310, %s26, 3
          %s1312 = smul.addr %s1311, 4
          %s1313 = smul.addr %s1312, 8
          %s1314 = scalar_lea.vmem %s7, %s1313
        $region68: #{tpu_custom_call.1} parent=59 // pred_fallthru
          _
      $region60: #{tpu_custom_call.1} parent=5 // pred_fallthru
        _
    $region6: #{tpu_custom_call.1} parent=1 // loop_footer
      %s24 = sadd.s32 1, %s20
    $region7: #{tpu_custom_call.1} parent=1 // loop_footer_branch
      %19 = sbr.rel target = $region3
    $region8: #{tpu_custom_call.1} parent=1 // loop_exit
      _
    %1315 = vsyncpa [#allocation4], 1
    %s1316 = scalar_lea.sflag [#allocation4], 1
    %1317 = vsyncpa %s1316, 1
    %1318 = vsyncpa [#allocation5], 1
    %s1319 = scalar_lea.sflag [#allocation5], 1
    %1320 = vsyncpa %s1319, 1

</llo_original>
